<compile_context>
chip_gen: v5e
topology: v5e:2x2
jax: 0.10.0
libtpu: 0.0.40
codegen_flags: <defaults>
</compile_context>

<pallas_src>
import functools

import jax
import jax.numpy as jnp
from jax.experimental import pallas as pl
from jax.experimental.pallas import tpu as pltpu


def _vis_embed_kernel(grid_ref, rowtok_ref, col_ref, gamma_ref, beta_ref,
                      out_ref, *, n_frm, eps):
    # grid_ref : (n_frm, TH, W, D)   (batch dim squeezed by BlockSpec)
    # rowtok_ref: (TH, D)  row positional emb + token-type emb (pre-folded)
    # col_ref  : (W, D)
    # gamma_ref, beta_ref: (1, D)
    # out_ref  : (TH, W, D)

    # ---- frame mean: incremental accumulation, fully unrolled (n_frm static)
    acc = grid_ref[0].astype(jnp.float32)                  # (TH, W, D)
    for f in range(1, n_frm):
        acc = acc + grid_ref[f].astype(jnp.float32)
    x = acc * jnp.float32(1.0 / n_frm)                     # (TH, W, D)

    # ---- 2D positional embeddings (+ token-type, folded into rowtok)
    x = x + rowtok_ref[...].astype(jnp.float32)[:, None, :]   # broadcast over W
    x = x + col_ref[...].astype(jnp.float32)[None, :, :]      # broadcast over TH

    # ---- LayerNorm over D, single-pass stats (f32)
    d = x.shape[-1]
    s1 = jnp.sum(x, axis=-1, keepdims=True)
    s2 = jnp.sum(x * x, axis=-1, keepdims=True)
    mu = s1 * jnp.float32(1.0 / d)
    var = jnp.maximum(s2 * jnp.float32(1.0 / d) - mu * mu, 0.0)
    xn = (x - mu) * jax.lax.rsqrt(var + eps)
    y = (xn * gamma_ref[...].astype(jnp.float32)[None, :, :]
         + beta_ref[...].astype(jnp.float32)[None, :, :])

    out_ref[...] = y.astype(out_ref.dtype)


def _choose_row_tile(H, n_frm, W, D, itemsize, budget_bytes=2 << 20):
    """Largest row-tile TH (divisor of H, multiple of 8 or == H) whose input
    block stays under the byte budget; falls back to the smallest candidate."""
    cands = sorted({d for d in range(8, H, 8) if H % d == 0} | {H})
    best = cands[0]
    for th in cands:
        if n_frm * th * W * D * itemsize <= budget_bytes:
            best = th
    return best


def visual_input_embedding(grid, row_emb, col_emb, tok_emb, gamma, beta,
                           *, eps=1e-12, row_tile=None):
    """grid: (B, n_frm, H, W, D); returns (B, H*W, D)."""
    B, n_frm, H, W, D = grid.shape

    # Glue (tiny one-time XLA ops): slice tables, fold token-type into rows.
    rowtok = row_emb[:H].astype(jnp.float32) + tok_emb[0].astype(jnp.float32)  # (H, D)
    col = col_emb[:W].astype(jnp.float32)                                      # (W, D)
    gamma2 = gamma.reshape(1, D).astype(jnp.float32)
    beta2 = beta.reshape(1, D).astype(jnp.float32)

    itemsize = jnp.dtype(grid.dtype).itemsize
    TH = row_tile if row_tile is not None else _choose_row_tile(
        H, n_frm, W, D, itemsize)
    assert H % TH == 0, "row tile must divide H"
    num_rt = H // TH

    # VMEM budget: double-buffered input + output blocks + small tables + slack.
    in_block_bytes = n_frm * TH * W * D * itemsize
    out_block_bytes = TH * W * D * itemsize
    small_bytes = (H + W + 2) * D * 4
    vmem_limit = max(2 * (in_block_bytes + out_block_bytes)
                     + 2 * small_bytes + (8 << 20), 16 << 20)

    kernel = functools.partial(_vis_embed_kernel, n_frm=n_frm, eps=eps)

    out = pl.pallas_call(
        kernel,
        out_shape=jax.ShapeDtypeStruct((B, H, W, D), grid.dtype),
        grid_spec=pltpu.PrefetchScalarGridSpec(
            num_scalar_prefetch=0,
            grid=(B, num_rt),
            in_specs=[
                # (batch squeezed, all frames, one row tile, full W, full D)
                pl.BlockSpec((None, n_frm, TH, W, D),
                             lambda b, r: (b, 0, r, 0, 0)),
                pl.BlockSpec((TH, D), lambda b, r: (r, 0)),   # rowtok
                pl.BlockSpec((W, D), lambda b, r: (0, 0)),    # col
                pl.BlockSpec((1, D), lambda b, r: (0, 0)),    # gamma
                pl.BlockSpec((1, D), lambda b, r: (0, 0)),    # beta
            ],
            out_specs=pl.BlockSpec((None, TH, W, D),
                                   lambda b, r: (b, r, 0, 0)),
        ),
        compiler_params=pltpu.CompilerParams(
            dimension_semantics=("parallel", "parallel"),
            vmem_limit_bytes=int(vmem_limit)),
    )(grid, rowtok, col, gamma2, beta2)

    # Free metadata reshape: (B, H, W, D) -> (B, H*W, D).
    return out.reshape(B, H * W, D)


def _reference(grid, row_emb, col_emb, tok_emb, gamma, beta, eps=1e-12):
    B, n_frm, H, W, D = grid.shape
    x = jnp.mean(grid.astype(jnp.float32), axis=1)
    x = x + row_emb[:H][None, :, None, :]
    x = x + col_emb[:W][None, None, :, :]
    x = x.reshape(B, H * W, D)
    x = x + tok_emb[:1][None]
    mu = jnp.mean(x, axis=-1, keepdims=True)
    var = jnp.mean((x - mu) ** 2, axis=-1, keepdims=True)
    return (x - mu) * jax.lax.rsqrt(var + eps) * gamma + beta


if __name__ == "__main__":
    key = jax.random.PRNGKey(0)
    # Small shapes; D = 128 keeps the output lane-dense.
    B, n_frm, H, W, D = 2, 3, 16, 16, 128
    max_rows, max_cols = 32, 32

    k_grid, k_row, k_col, k_tok = jax.random.split(key, 4)

    grid = jax.random.normal(k_grid, (B, n_frm, H, W, D), dtype=jnp.float32)

    # Deterministic synthetic parameters (BERT-style init, scale 0.02)
    row_emb = 0.02 * jax.random.normal(k_row, (max_rows, D), dtype=jnp.float32)
    col_emb = 0.02 * jax.random.normal(k_col, (max_cols, D), dtype=jnp.float32)
    tok_emb = 0.02 * jax.random.normal(k_tok, (1, D), dtype=jnp.float32)
    gamma = jnp.ones((D,), dtype=jnp.float32)    # LayerNorm weight (default init)
    beta = jnp.zeros((D,), dtype=jnp.float32)    # LayerNorm bias   (default init)

    ref = _reference(grid, row_emb, col_emb, tok_emb, gamma, beta)

    # Auto row-tile (whole H fits the budget at this size).
    out = visual_input_embedding(grid, row_emb, col_emb, tok_emb, gamma, beta)
    out = jax.block_until_ready(out)
    assert out.shape == (B, H * W, D)
    assert jnp.allclose(out, ref, atol=1e-4, rtol=1e-4)

    # Exercise the spatial-tiling path explicitly (TH < H).
    out_tiled = visual_input_embedding(grid, row_emb, col_emb, tok_emb,
                                       gamma, beta, row_tile=8)
    out_tiled = jax.block_until_ready(out_tiled)
    assert jnp.allclose(out_tiled, ref, atol=1e-4, rtol=1e-4)

    print("KERNEL_OK")
</pallas_src>

<mosaic_0001>
module attributes {stable_mosaic.version = 11 : i64} {
  func.func @_vis_embed_kernel(%arg0: i32, %arg1: i32, %arg2: memref<1x3x16x16x128xf32, #tpu.memory_space<vmem>>, %arg3: memref<16x128xf32, #tpu.memory_space<vmem>>, %arg4: memref<16x128xf32, #tpu.memory_space<vmem>>, %arg5: memref<1x128xf32, #tpu.memory_space<vmem>>, %arg6: memref<1x128xf32, #tpu.memory_space<vmem>>, %arg7: memref<1x16x16x128xf32, #tpu.memory_space<vmem>>) attributes {dimension_semantics = [#tpu.dimension_semantics<parallel>, #tpu.dimension_semantics<parallel>], iteration_bounds = array<i64: 2, 1>, scalar_prefetch = 0 : i64, scratch_operands = 0 : i64, tpu.core_type = #tpu.core_type<tc>, window_params = [{transform_indices = @transform_0, window_bounds = array<i64: 1, 3, 16, 16, 128>}, {transform_indices = @transform_1, window_bounds = array<i64: 16, 128>}, {pipeline_mode = #tpu.pipeline_mode<synchronous>, transform_indices = @transform_2, window_bounds = array<i64: 16, 128>}, {pipeline_mode = #tpu.pipeline_mode<synchronous>, transform_indices = @transform_3, window_bounds = array<i64: 1, 128>}, {pipeline_mode = #tpu.pipeline_mode<synchronous>, transform_indices = @transform_4, window_bounds = array<i64: 1, 128>}, {transform_indices = @transform_5, window_bounds = array<i64: 1, 16, 16, 128>}]} {
    %c0 = arith.constant 0 : index
    %c0_0 = arith.constant 0 : index
    %c0_1 = arith.constant 0 : index
    %c0_2 = arith.constant 0 : index
    %c0_3 = arith.constant 0 : index
    %0 = vector.load %arg2[%c0, %c0_0, %c0_1, %c0_2, %c0_3] : memref<1x3x16x16x128xf32, #tpu.memory_space<vmem>>, vector<1x1x16x16x128xf32>
    %1 = vector.shape_cast %0 : vector<1x1x16x16x128xf32> to vector<16x16x128xf32>
    %c0_4 = arith.constant 0 : index
    %c1 = arith.constant 1 : index
    %c0_5 = arith.constant 0 : index
    %c0_6 = arith.constant 0 : index
    %c0_7 = arith.constant 0 : index
    %2 = vector.load %arg2[%c0_4, %c1, %c0_5, %c0_6, %c0_7] : memref<1x3x16x16x128xf32, #tpu.memory_space<vmem>>, vector<1x1x16x16x128xf32>
    %3 = vector.shape_cast %2 : vector<1x1x16x16x128xf32> to vector<16x16x128xf32>
    %4 = arith.addf %1, %3 : vector<16x16x128xf32>
    %c0_8 = arith.constant 0 : index
    %c2 = arith.constant 2 : index
    %c0_9 = arith.constant 0 : index
    %c0_10 = arith.constant 0 : index
    %c0_11 = arith.constant 0 : index
    %5 = vector.load %arg2[%c0_8, %c2, %c0_9, %c0_10, %c0_11] : memref<1x3x16x16x128xf32, #tpu.memory_space<vmem>>, vector<1x1x16x16x128xf32>
    %6 = vector.shape_cast %5 : vector<1x1x16x16x128xf32> to vector<16x16x128xf32>
    %7 = arith.addf %4, %6 : vector<16x16x128xf32>
    %cst = arith.constant 0.333333343 : f32
    %8 = vector.broadcast %cst : f32 to vector<16x16x128xf32>
    %9 = arith.mulf %7, %8 : vector<16x16x128xf32>
    %c0_12 = arith.constant 0 : index
    %c0_13 = arith.constant 0 : index
    %10 = vector.load %arg3[%c0_12, %c0_13] : memref<16x128xf32, #tpu.memory_space<vmem>>, vector<16x128xf32>
    %11 = vector.shape_cast %10 : vector<16x128xf32> to vector<16x1x128xf32>
    %12 = vector.broadcast %11 : vector<16x1x128xf32> to vector<16x16x128xf32>
    %13 = arith.addf %9, %12 : vector<16x16x128xf32>
    %c0_14 = arith.constant 0 : index
    %c0_15 = arith.constant 0 : index
    %14 = vector.load %arg4[%c0_14, %c0_15] : memref<16x128xf32, #tpu.memory_space<vmem>>, vector<16x128xf32>
    %15 = vector.shape_cast %14 : vector<16x128xf32> to vector<1x16x128xf32>
    %16 = vector.broadcast %15 : vector<1x16x128xf32> to vector<16x16x128xf32>
    %17 = arith.addf %13, %16 : vector<16x16x128xf32>
    %cst_16 = arith.constant dense<0.000000e+00> : vector<16x16xf32>
    %18 = vector.multi_reduction <add>, %17, %cst_16 [2] : vector<16x16x128xf32> to vector<16x16xf32>
    %19 = vector.shape_cast %18 : vector<16x16xf32> to vector<16x16x1xf32>
    %20 = arith.mulf %17, %17 : vector<16x16x128xf32>
    %cst_17 = arith.constant dense<0.000000e+00> : vector<16x16xf32>
    %21 = vector.multi_reduction <add>, %20, %cst_17 [2] : vector<16x16x128xf32> to vector<16x16xf32>
    %22 = vector.shape_cast %21 : vector<16x16xf32> to vector<16x16x1xf32>
    %cst_18 = arith.constant 7.812500e-03 : f32
    %23 = vector.broadcast %cst_18 : f32 to vector<16x16x1xf32>
    %24 = arith.mulf %19, %23 : vector<16x16x1xf32>
    %cst_19 = arith.constant 7.812500e-03 : f32
    %25 = vector.broadcast %cst_19 : f32 to vector<16x16x1xf32>
    %26 = arith.mulf %22, %25 : vector<16x16x1xf32>
    %27 = arith.mulf %24, %24 : vector<16x16x1xf32>
    %28 = arith.subf %26, %27 : vector<16x16x1xf32>
    %cst_20 = arith.constant 0.000000e+00 : f32
    %29 = vector.broadcast %cst_20 : f32 to vector<16x16x1xf32>
    %30 = arith.maximumf %28, %29 : vector<16x16x1xf32>
    %31 = vector.broadcast %24 : vector<16x16x1xf32> to vector<16x16x128xf32>
    %32 = arith.subf %17, %31 : vector<16x16x128xf32>
    %cst_21 = arith.constant 9.99999996E-13 : f32
    %33 = vector.broadcast %cst_21 : f32 to vector<16x16x1xf32>
    %34 = arith.addf %30, %33 : vector<16x16x1xf32>
    %35 = math.rsqrt %34 : vector<16x16x1xf32>
    %36 = vector.broadcast %35 : vector<16x16x1xf32> to vector<16x16x128xf32>
    %37 = arith.mulf %32, %36 : vector<16x16x128xf32>
    %c0_22 = arith.constant 0 : index
    %c0_23 = arith.constant 0 : index
    %38 = vector.load %arg5[%c0_22, %c0_23] : memref<1x128xf32, #tpu.memory_space<vmem>>, vector<1x128xf32>
    %39 = vector.shape_cast %38 : vector<1x128xf32> to vector<1x1x128xf32>
    %40 = vector.broadcast %39 : vector<1x1x128xf32> to vector<16x16x128xf32>
    %41 = arith.mulf %37, %40 : vector<16x16x128xf32>
    %c0_24 = arith.constant 0 : index
    %c0_25 = arith.constant 0 : index
    %42 = vector.load %arg6[%c0_24, %c0_25] : memref<1x128xf32, #tpu.memory_space<vmem>>, vector<1x128xf32>
    %43 = vector.shape_cast %42 : vector<1x128xf32> to vector<1x1x128xf32>
    %44 = vector.broadcast %43 : vector<1x1x128xf32> to vector<16x16x128xf32>
    %45 = arith.addf %41, %44 : vector<16x16x128xf32>
    %c0_26 = arith.constant 0 : index
    %c0_27 = arith.constant 0 : index
    %c0_28 = arith.constant 0 : index
    %c0_29 = arith.constant 0 : index
    %46 = vector.load %arg7[%c0_26, %c0_27, %c0_28, %c0_29] : memref<1x16x16x128xf32, #tpu.memory_space<vmem>>, vector<1x16x16x128xf32>
    %47 = vector.shape_cast %46 : vector<1x16x16x128xf32> to vector<16x16x128xf32>
    %48 = vector.shape_cast %45 : vector<16x16x128xf32> to vector<1x16x16x128xf32>
    tpu.vector_store %arg7[%c0_26, %c0_27, %c0_28, %c0_29], %48 {strides = array<i32>} : memref<1x16x16x128xf32, #tpu.memory_space<vmem>>, vector<1x16x16x128xf32>,
    return
  }
  func.func @transform_0(%arg0: i32, %arg1: i32) -> (i32, i32, i32, i32, i32) {
    %c0_i32 = arith.constant 0 : i32
    %c0_i32_0 = arith.constant 0 : i32
    %c0_i32_1 = arith.constant 0 : i32
    %c0_i32_2 = arith.constant 0 : i32
    return %arg0, %c0_i32, %arg1, %c0_i32_0, %c0_i32_1 : i32, i32, i32, i32, i32
  }
  func.func @transform_1(%arg0: i32, %arg1: i32) -> (i32, i32) {
    %c0_i32 = arith.constant 0 : i32
    %c0_i32_0 = arith.constant 0 : i32
    return %arg1, %c0_i32 : i32, i32
  }
  func.func @transform_2(%arg0: i32, %arg1: i32) -> (i32, i32) {
    %c0_i32 = arith.constant 0 : i32
    %c0_i32_0 = arith.constant 0 : i32
    %c0_i32_1 = arith.constant 0 : i32
    return %c0_i32, %c0_i32_0 : i32, i32
  }
  func.func @transform_3(%arg0: i32, %arg1: i32) -> (i32, i32) {
    %c0_i32 = arith.constant 0 : i32
    %c0_i32_0 = arith.constant 0 : i32
    %c0_i32_1 = arith.constant 0 : i32
    return %c0_i32, %c0_i32_0 : i32, i32
  }
  func.func @transform_4(%arg0: i32, %arg1: i32) -> (i32, i32) {
    %c0_i32 = arith.constant 0 : i32
    %c0_i32_0 = arith.constant 0 : i32
    %c0_i32_1 = arith.constant 0 : i32
    return %c0_i32, %c0_i32_0 : i32, i32
  }
  func.func @transform_5(%arg0: i32, %arg1: i32) -> (i32, i32, i32, i32) {
    %c0_i32 = arith.constant 0 : i32
    %c0_i32_0 = arith.constant 0 : i32
    %c0_i32_1 = arith.constant 0 : i32
    return %arg0, %arg1, %c0_i32, %c0_i32_0 : i32, i32, i32, i32
  }
}

</mosaic_0001>

<llo_original>
// kernel: tpu_custom_call.1
$region0: #{tpu_custom_call.1}
  #allocation0 [shape = 'u32[]', space=smem, size = 0x4, offset = 0x4, fixed_abs, tag = 'smem constant byte address 0x4 - core index']
  #allocation1 [shape = 'u32[72,128]{1,0:T(1,128)}', space=vmem, size = 0x9000, scoped, tag = 'internal scratch']
  %s0 = inlined_call_operand.hbm [shape: f32[2,3,16,16,128], index: 0, kind: input, shape index: {}]
  %s1 = inlined_call_operand.hbm [shape: f32[16,128], index: 1, kind: input, shape index: {}]
  %s2 = inlined_call_operand.hbm [shape: f32[16,128], index: 2, kind: input, shape index: {}]
  %s3 = inlined_call_operand.vmem [shape: f32[1,128], index: 3, kind: input, shape index: {}]
  %s4 = inlined_call_operand.vmem [shape: f32[1,128], index: 4, kind: input, shape index: {}]
  %s5 = inlined_call_operand.hbm [shape: f32[2,16,16,128], index: 5, kind: output, shape index: {}]
  %s6 = sld [smem:[#allocation0]]
  $region65: #{tpu_custom_call.1} parent=0
    _
  %s8 = ssub.s32 1, %s6
  %s9 = scalar_select 0, %s8, %s6
  $region1: #{tpu_custom_call.1} parent=0
    #allocation2 [shape = 'u8[786432]{0}', space=vmem, size = 0xc0000, scoped, tag = 'input window, operand 0']
    #allocation3 [shape = 's32[2]{0}', space=sflag, size = 0x8, scoped, tag = 'scoped memory for tpu_custom_call.1']
    #allocation4 [shape = 's32[2]{0}', space=sflag, size = 0x8, scoped, tag = 'scoped memory for tpu_custom_call.1']
    #allocation5 [shape = 'u8[8192]{0}', space=vmem, size = 0x2000, scoped, tag = 'input window, operand 1, single buffered']
    #allocation6 [shape = 's32[1]{0}', space=sflag, size = 0x4, scoped, tag = 'scoped memory for tpu_custom_call.1']
    #allocation7 [shape = 'u8[8192]{0}', space=vmem, size = 0x2000, scoped, tag = 'input window, operand 2, single buffered']
    #allocation8 [shape = 'u8[262144]{0}', space=vmem, size = 0x40000, scoped, tag = 'output window, operand 0']
    %10 = vsyncpa [#allocation3], 0
    %s11 = scalar_lea.sflag [#allocation3], 1
    %12 = vsyncpa %s11, 0
    %13 = vsyncpa [#allocation6], 0
    %14 = vsyncpa [#allocation4], 0
    %s15 = scalar_lea.sflag [#allocation4], 1
    %16 = vsyncpa %s15, 0
    loop: start=0, step=1, limit=4
    $region2: #{tpu_custom_call.1} parent=1 // loop_pre_header
      _
    $region3: #{tpu_custom_call.1} parent=1 // loop_header
      %s18 = sphi 0, %s22
      %p19 = scmp.ge.s32.totalorder %s18, 4
      %s25 = sphi 0, %s37
      %s26 = sphi 0, %s33
      %s27 = sphi 0, %s25
      %s28 = sphi 0, %s26
      %s29 = sphi 0, %s27
      %s30 = sphi 0, %s28
      %s42 = sphi 0, %s44
      %s45 = sphi 0, %s42
      %s46 = sphi 0, %s45
      %s62 = sphi 0, %s46
      %s68 = sphi 0, %s70
      %s71 = sphi 0, %s68
      %s72 = sphi 0, %s71
      %s88 = sphi 0, %s72
      %s92 = sphi 0, %s92
      %s94 = sphi 0, %s92
      %s95 = sphi 0, %s94
      %s109 = sphi 0, %s95
      %s113 = sphi 0, %s113
      %s115 = sphi 0, %s113
      %s116 = sphi 0, %s115
      %s130 = sphi 0, %s116
      %s134 = sphi 0, %s134
      %s136 = sphi 0, %s134
      %s137 = sphi 0, %s136
      %s151 = sphi 0, %s137
      %s159 = sphi 0, %s161
      %s162 = sphi 0, %s159
      %s163 = sphi 0, %s162
      %s179 = sphi 0, %s163
    $region4: #{tpu_custom_call.1} parent=1 // loop_header_branch
      %21 = sbr.rel (%p19) target = $region8
    $region5: #{tpu_custom_call.1} parent=1 // loop_body
      %s23 = ssub.s32 %s18, 1
      %s24 = ssub.s32 %s18, 2
      %s31 = sadd.s32 1, %s26
      %p32 = scmp.ge.s32.totalorder %s31, 1
      %s33 = scalar_select %p32, 0, %s31
      %s34 = sadd.s32 1, %s25
      %s35 = scalar_select %p32, %s34, %s25
      %p36 = scmp.ge.s32.totalorder %s35, 2
      %s37 = scalar_select %p36, 0, %s35
      %s38 = ssub.s32 %s25, %s37
      %s39 = ssub.s32 %s26, %s33
      %s40 = sor.u32 %s38, %s39
      %p41 = scmp.eq.s32.totalorder %s40, 0
      %s43 = sadd.s32 %s42, 1
      %s44 = scalar_select %p41, %s42, %s43
      %p47 = pneg %p41
      %p48 = scmp.eq.s32.totalorder %s18, 1
      %p49 = por %p47, %p48
      %p50 = scmp.ne.s32.totalorder %s42, %s45
      %p51 = scmp.eq.s32.totalorder %s18, 0
      %p52 = por %p50, %p51
      %p53 = scmp.ne.s32.totalorder %s42, %s45
      %p54 = scmp.eq.s32.totalorder %s23, 1
      %p55 = por %p53, %p54
      %p56 = scmp.ne.s32.totalorder %s45, %s46
      %p57 = scmp.eq.s32.totalorder %s23, 0
      %p58 = por %p56, %p57
      %p59 = scmp.ne.s32.totalorder %s45, %s46
      %p60 = scmp.eq.s32.totalorder %s24, 1
      %p61 = por %p59, %p60
      %p63 = scmp.ne.s32.totalorder %s46, %s62
      %p64 = scmp.eq.s32.totalorder %s24, 0
      %p65 = por %p63, %p64
      %s66 = ssub.s32 %s26, %s33
      %p67 = scmp.eq.s32.totalorder %s66, 0
      %s69 = sadd.s32 %s68, 1
      %s70 = scalar_select %p67, %s68, %s69
      %p73 = pneg %p67
      %p74 = scmp.eq.s32.totalorder %s18, 1
      %p75 = por %p73, %p74
      %p76 = scmp.ne.s32.totalorder %s68, %s71
      %p77 = scmp.eq.s32.totalorder %s18, 0
      %p78 = por %p76, %p77
      %p79 = scmp.ne.s32.totalorder %s68, %s71
      %p80 = scmp.eq.s32.totalorder %s23, 1
      %p81 = por %p79, %p80
      %p82 = scmp.ne.s32.totalorder %s71, %s72
      %p83 = scmp.eq.s32.totalorder %s23, 0
      %p84 = por %p82, %p83
      %p85 = scmp.ne.s32.totalorder %s71, %s72
      %p86 = scmp.eq.s32.totalorder %s24, 1
      %p87 = por %p85, %p86
      %p89 = scmp.ne.s32.totalorder %s72, %s88
      %p90 = scmp.eq.s32.totalorder %s24, 0
      %p91 = por %p89, %p90
      %s93 = sadd.s32 %s92, 1
      %p96 = scmp.eq.s32.totalorder %s18, 1
      %p97 = scmp.ne.s32.totalorder %s92, %s94
      %p98 = scmp.eq.s32.totalorder %s18, 0
      %p99 = por %p97, %p98
      %p100 = scmp.ne.s32.totalorder %s92, %s94
      %p101 = scmp.eq.s32.totalorder %s23, 1
      %p102 = por %p100, %p101
      %p103 = scmp.ne.s32.totalorder %s94, %s95
      %p104 = scmp.eq.s32.totalorder %s23, 0
      %p105 = por %p103, %p104
      %p106 = scmp.ne.s32.totalorder %s94, %s95
      %p107 = scmp.eq.s32.totalorder %s24, 1
      %p108 = por %p106, %p107
      %p110 = scmp.ne.s32.totalorder %s95, %s109
      %p111 = scmp.eq.s32.totalorder %s24, 0
      %p112 = por %p110, %p111
      %s114 = sadd.s32 %s113, 1
      %p117 = scmp.eq.s32.totalorder %s18, 1
      %p118 = scmp.ne.s32.totalorder %s113, %s115
      %p119 = scmp.eq.s32.totalorder %s18, 0
      %p120 = por %p118, %p119
      %p121 = scmp.ne.s32.totalorder %s113, %s115
      %p122 = scmp.eq.s32.totalorder %s23, 1
      %p123 = por %p121, %p122
      %p124 = scmp.ne.s32.totalorder %s115, %s116
      %p125 = scmp.eq.s32.totalorder %s23, 0
      %p126 = por %p124, %p125
      %p127 = scmp.ne.s32.totalorder %s115, %s116
      %p128 = scmp.eq.s32.totalorder %s24, 1
      %p129 = por %p127, %p128
      %p131 = scmp.ne.s32.totalorder %s116, %s130
      %p132 = scmp.eq.s32.totalorder %s24, 0
      %p133 = por %p131, %p132
      %s135 = sadd.s32 %s134, 1
      %p138 = scmp.eq.s32.totalorder %s18, 1
      %p139 = scmp.ne.s32.totalorder %s134, %s136
      %p140 = scmp.eq.s32.totalorder %s18, 0
      %p141 = por %p139, %p140
      %p142 = scmp.ne.s32.totalorder %s134, %s136
      %p143 = scmp.eq.s32.totalorder %s23, 1
      %p144 = por %p142, %p143
      %p145 = scmp.ne.s32.totalorder %s136, %s137
      %p146 = scmp.eq.s32.totalorder %s23, 0
      %p147 = por %p145, %p146
      %p148 = scmp.ne.s32.totalorder %s136, %s137
      %p149 = scmp.eq.s32.totalorder %s24, 1
      %p150 = por %p148, %p149
      %p152 = scmp.ne.s32.totalorder %s137, %s151
      %p153 = scmp.eq.s32.totalorder %s24, 0
      %p154 = por %p152, %p153
      %s155 = ssub.s32 %s25, %s37
      %s156 = ssub.s32 %s26, %s33
      %s157 = sor.u32 %s155, %s156
      %p158 = scmp.eq.s32.totalorder %s157, 0
      %s160 = sadd.s32 %s159, 1
      %s161 = scalar_select %p158, %s159, %s160
      %p164 = pneg %p158
      %p165 = scmp.eq.s32.totalorder %s18, 1
      %p166 = por %p164, %p165
      %p167 = scmp.ne.s32.totalorder %s159, %s162
      %p168 = scmp.eq.s32.totalorder %s18, 0
      %p169 = por %p167, %p168
      %p170 = scmp.ne.s32.totalorder %s159, %s162
      %p171 = scmp.eq.s32.totalorder %s23, 1
      %p172 = por %p170, %p171
      %p173 = scmp.ne.s32.totalorder %s162, %s163
      %p174 = scmp.eq.s32.totalorder %s23, 0
      %p175 = por %p173, %p174
      %p176 = scmp.ne.s32.totalorder %s162, %s163
      %p177 = scmp.eq.s32.totalorder %s24, 1
      %p178 = por %p176, %p177
      %p180 = scmp.ne.s32.totalorder %s163, %s179
      %p181 = scmp.eq.s32.totalorder %s24, 0
      %p182 = por %p180, %p181
      %p183 = scmp.le.s32.totalorder 1, %s18
      %p184 = scmp.lt.s32.totalorder %s18, 3
      %p185 = pnand %p183, %p184
      %p186 = pneg %p185
      // Predicated region
      $region9: #{tpu_custom_call.1} parent=5 // pred_check
        _
      $region10: #{tpu_custom_call.1} parent=5 // pred_check_branch
        %188 = sbr.rel (%p185) target = $region12
      $region11: #{tpu_custom_call.1} parent=5 // pred_region
        %s189 = ssub.s32 %s18, 1
        // Predicated region
        $region13: #{tpu_custom_call.1} parent=11 // pred_check
          %p190 = pneg %p84
        $region14: #{tpu_custom_call.1} parent=11 // pred_check_branch
          %192 = sbr.rel (%p190) target = $region16
        $region15: #{tpu_custom_call.1} parent=11 // pred_region
          %s193 = smul.u32 2, %s28
          %195 = vsyncadd [#allocation6], 0
          %s196 = smul.addr %s193, 8
          %s197 = scalar_lea.hbm %s1, %s196
          %s198 = sshll.u32 %s197, 4
          %s199 = int_to_ptr.hbm [resolvable:$true] %s198
          %s200 = sshll.u32 [#allocation5], 4
          %s201 = int_to_ptr.vmem [resolvable:$true] %s200
          %206 = dma.hbm_to_vmem [thread:$0]  %s199, 256, %s201, [#allocation6], 128, 128, 8
        $region16: #{tpu_custom_call.1} parent=11 // pred_fallthru
          _
        // Predicated region
        $region17: #{tpu_custom_call.1} parent=11 // pred_check
          %p207 = pneg %p105
        $region18: #{tpu_custom_call.1} parent=11 // pred_check_branch
          %209 = sbr.rel (%p207) target = $region20
        $region19: #{tpu_custom_call.1} parent=11 // pred_region
          %211 = vsyncadd [#allocation6], 0
          %s212 = sshll.u32 %s2, 4
          %s213 = int_to_ptr.hbm [resolvable:$true] %s212
          %s214 = sshll.u32 [#allocation7], 4
          %s215 = int_to_ptr.vmem [resolvable:$true] %s214
          %220 = dma.hbm_to_vmem [thread:$0]  %s213, 256, %s215, [#allocation6], 128, 128, 8
        $region20: #{tpu_custom_call.1} parent=11 // pred_fallthru
          _
        // Predicated region
        $region21: #{tpu_custom_call.1} parent=11 // pred_check
          %p221 = pneg %p126
        $region22: #{tpu_custom_call.1} parent=11 // pred_check_branch
          %223 = sbr.rel (%p221) target = $region24
        $region23: #{tpu_custom_call.1} parent=11 // pred_region
          _
        $region24: #{tpu_custom_call.1} parent=11 // pred_fallthru
          _
        // Predicated region
        $region25: #{tpu_custom_call.1} parent=11 // pred_check
          %p224 = pneg %p147
        $region26: #{tpu_custom_call.1} parent=11 // pred_check_branch
          %226 = sbr.rel (%p224) target = $region28
        $region27: #{tpu_custom_call.1} parent=11 // pred_region
          _
        $region28: #{tpu_custom_call.1} parent=11 // pred_fallthru
          _
      $region12: #{tpu_custom_call.1} parent=5 // pred_fallthru
        _
      %p227 = scmp.lt.s32.totalorder %s18, 2
      // Predicated region
      $region29: #{tpu_custom_call.1} parent=5 // pred_check
        %p228 = pneg %p227
      $region30: #{tpu_custom_call.1} parent=5 // pred_check_branch
        %230 = sbr.rel (%p228) target = $region32
      $region31: #{tpu_custom_call.1} parent=5 // pred_region
        // Predicated region
        $region33: #{tpu_custom_call.1} parent=31 // pred_check
          %p231 = pneg %p52
        $region34: #{tpu_custom_call.1} parent=31 // pred_check_branch
          %233 = sbr.rel (%p231) target = $region36
        $region35: #{tpu_custom_call.1} parent=31 // pred_region
          %s234 = sand.u32 %s42, 1
          %s235 = scalar_lea.sflag [#allocation3], %s234
          %s236 = sand.u32 %s42, 1
          %s237 = smul.addr %s236, 768
          %s238 = scalar_lea.vmem [#allocation2], %s237
          %s239 = smul.u32 16, %s26
          %241 = vsyncadd %s235, 0
          %s242 = smul.addr %s239, 2
          %s243 = smul.addr %s25, 96
          %s244 = sadd.s32 %s242, %s243
          %s245 = smul.addr %s244, 8
          %s246 = scalar_lea.hbm %s0, %s245
          %s247 = sshll.u32 %s246, 4
          %s248 = int_to_ptr.hbm [resolvable:$true] %s247
          %s249 = sshll.u32 %s238, 4
          %s250 = int_to_ptr.vmem [resolvable:$true] %s249
          %255 = dma.hbm_to_vmem [thread:$0]  %s248, 12288, %s250, %s235, 128, 128, 8
        $region36: #{tpu_custom_call.1} parent=31 // pred_fallthru
          _
      $region32: #{tpu_custom_call.1} parent=5 // pred_fallthru
        _
      %p256 = scmp.le.s32.totalorder 1, %s18
      %p257 = scmp.lt.s32.totalorder %s18, 3
      %p258 = pnand %p256, %p257
      %p259 = pneg %p258
      // Predicated region
      $region37: #{tpu_custom_call.1} parent=5 // pred_check
        _
      $region38: #{tpu_custom_call.1} parent=5 // pred_check_branch
        %261 = sbr.rel (%p258) target = $region40
      $region39: #{tpu_custom_call.1} parent=5 // pred_region
        %s262 = ssub.s32 %s18, 1
        %s263 = sand.u32 %s45, 1
        %s264 = scalar_lea.sflag [#allocation3], %s263
        %s265 = sand.u32 %s45, 1
        %s266 = smul.addr %s265, 768
        %s267 = scalar_lea.vmem [#allocation2], %s266
        // Predicated region
        $region41: #{tpu_custom_call.1} parent=39 // pred_check
          %p268 = pneg %p58
        $region42: #{tpu_custom_call.1} parent=39 // pred_check_branch
          %270 = sbr.rel (%p268) target = $region44
        $region43: #{tpu_custom_call.1} parent=39 // pred_region
          %272 = dma.done %s264, 12288
        $region44: #{tpu_custom_call.1} parent=39 // pred_fallthru
          _
        // Predicated region
        $region45: #{tpu_custom_call.1} parent=39 // pred_check
          %p273 = pneg %p84
        $region46: #{tpu_custom_call.1} parent=39 // pred_check_branch
          %275 = sbr.rel (%p273) target = $region48
        $region47: #{tpu_custom_call.1} parent=39 // pred_region
          %277 = dma.done [#allocation6], 256
        $region48: #{tpu_custom_call.1} parent=39 // pred_fallthru
          _
        // Predicated region
        $region49: #{tpu_custom_call.1} parent=39 // pred_check
          %p278 = pneg %p105
        $region50: #{tpu_custom_call.1} parent=39 // pred_check_branch
          %280 = sbr.rel (%p278) target = $region52
        $region51: #{tpu_custom_call.1} parent=39 // pred_region
          %282 = dma.done [#allocation6], 256
        $region52: #{tpu_custom_call.1} parent=39 // pred_fallthru
          _
        %s283 = sand.u32 %s45, 1
        %s284 = scalar_lea.sflag [#allocation3], %s283
        %s285 = sand.u32 %s45, 1
        %s286 = smul.addr %s285, 768
        %s287 = scalar_lea.vmem [#allocation2], %s286
        %p288 = pneg %p58
        %p289 = pneg %p55
        %p290 = pneg %p84
        %p291 = pneg %p81
        %p292 = pneg %p105
        %p293 = pneg %p102
        %p294 = pneg %p126
        %p295 = pneg %p123
        %p296 = pneg %p147
        %p297 = pneg %p144
        %p298 = pneg %p175
        %p299 = pneg %p172
        %s300 = sand.u32 %s162, 1
        %s301 = scalar_lea.sflag [#allocation4], %s300
        %s302 = sand.u32 %s162, 1
        %s303 = smul.addr %s302, 256
        %s304 = scalar_lea.vmem [#allocation8], %s303
        %s305 = smul.u32 16, %s28
        %s306 = smul.u32 2, %s28
        %s307 = smul.u32 16, %s28
        %v308 = vld [vmem:[%s267] sm:$0xff]
        %v309 = vld [vmem:[%s267 + $0x8] sm:$0xff]
        %v310 = vld [vmem:[%s267 + $0x10] sm:$0xff]
        %v311 = vld [vmem:[%s267 + $0x18] sm:$0xff]
        %v312 = vld [vmem:[%s267 + $0x20] sm:$0xff]
        %v313 = vld [vmem:[%s267 + $0x28] sm:$0xff]
        %v314 = vld [vmem:[%s267 + $0x30] sm:$0xff]
        %v315 = vld [vmem:[%s267 + $0x38] sm:$0xff]
        %v316 = vld [vmem:[%s267 + $0x40] sm:$0xff]
        %v317 = vld [vmem:[%s267 + $0x48] sm:$0xff]
        %v318 = vld [vmem:[%s267 + $0x50] sm:$0xff]
        %v319 = vld [vmem:[%s267 + $0x58] sm:$0xff]
        %v320 = vld [vmem:[%s267 + $0x60] sm:$0xff]
        %v321 = vld [vmem:[%s267 + $0x68] sm:$0xff]
        %v322 = vld [vmem:[%s267 + $0x70] sm:$0xff]
        %v323 = vld [vmem:[%s267 + $0x78] sm:$0xff]
        %v324 = vld [vmem:[%s267 + $0x80] sm:$0xff]
        %v325 = vld [vmem:[%s267 + $0x88] sm:$0xff]
        %v326 = vld [vmem:[%s267 + $0x90] sm:$0xff]
        %v327 = vld [vmem:[%s267 + $0x98] sm:$0xff]
        %v328 = vld [vmem:[%s267 + $0xa0] sm:$0xff]
        %v329 = vld [vmem:[%s267 + $0xa8] sm:$0xff]
        %v330 = vld [vmem:[%s267 + $0xb0] sm:$0xff]
        %v331 = vld [vmem:[%s267 + $0xb8] sm:$0xff]
        %v332 = vld [vmem:[%s267 + $0xc0] sm:$0xff]
        %v333 = vld [vmem:[%s267 + $0xc8] sm:$0xff]
        %v334 = vld [vmem:[%s267 + $0xd0] sm:$0xff]
        %v335 = vld [vmem:[%s267 + $0xd8] sm:$0xff]
        %v336 = vld [vmem:[%s267 + $0xe0] sm:$0xff]
        %v337 = vld [vmem:[%s267 + $0xe8] sm:$0xff]
        %v338 = vld [vmem:[%s267 + $0xf0] sm:$0xff]
        %v339 = vld [vmem:[%s267 + $0xf8] sm:$0xff]
        %s340 = scalar_lea.vmem %s267, 256 [#allocation2]
        %v341 = vld [vmem:[%s340] sm:$0xff]
        %v342 = vld [vmem:[%s340 + $0x8] sm:$0xff]
        %v343 = vld [vmem:[%s340 + $0x10] sm:$0xff]
        %v344 = vld [vmem:[%s340 + $0x18] sm:$0xff]
        %v345 = vld [vmem:[%s340 + $0x20] sm:$0xff]
        %v346 = vld [vmem:[%s340 + $0x28] sm:$0xff]
        %v347 = vld [vmem:[%s340 + $0x30] sm:$0xff]
        %v348 = vld [vmem:[%s340 + $0x38] sm:$0xff]
        %v349 = vld [vmem:[%s340 + $0x40] sm:$0xff]
        %v350 = vld [vmem:[%s340 + $0x48] sm:$0xff]
        %v351 = vld [vmem:[%s340 + $0x50] sm:$0xff]
        %v352 = vld [vmem:[%s340 + $0x58] sm:$0xff]
        %v353 = vld [vmem:[%s340 + $0x60] sm:$0xff]
        %v354 = vld [vmem:[%s340 + $0x68] sm:$0xff]
        %v355 = vld [vmem:[%s340 + $0x70] sm:$0xff]
        %v356 = vld [vmem:[%s340 + $0x78] sm:$0xff]
        %v357 = vld [vmem:[%s340 + $0x80] sm:$0xff]
        %v358 = vld [vmem:[%s340 + $0x88] sm:$0xff]
        %v359 = vld [vmem:[%s340 + $0x90] sm:$0xff]
        %v360 = vld [vmem:[%s340 + $0x98] sm:$0xff]
        %v361 = vld [vmem:[%s340 + $0xa0] sm:$0xff]
        %v362 = vld [vmem:[%s340 + $0xa8] sm:$0xff]
        %v363 = vld [vmem:[%s340 + $0xb0] sm:$0xff]
        %v364 = vld [vmem:[%s340 + $0xb8] sm:$0xff]
        %v365 = vld [vmem:[%s340 + $0xc0] sm:$0xff]
        %v366 = vld [vmem:[%s340 + $0xc8] sm:$0xff]
        %v367 = vld [vmem:[%s340 + $0xd0] sm:$0xff]
        %v368 = vld [vmem:[%s340 + $0xd8] sm:$0xff]
        %v369 = vld [vmem:[%s340 + $0xe0] sm:$0xff]
        %v370 = vld [vmem:[%s340 + $0xe8] sm:$0xff]
        %v371 = vld [vmem:[%s340 + $0xf0] sm:$0xff]
        %v372 = vld [vmem:[%s340 + $0xf8] sm:$0xff]
        %v373 = vadd.f32 %v308, %v341
        %v374 = vadd.f32 %v309, %v342
        %v375 = vadd.f32 %v310, %v343
        %v376 = vadd.f32 %v311, %v344
        %v377 = vadd.f32 %v312, %v345
        %v378 = vadd.f32 %v313, %v346
        %v379 = vadd.f32 %v314, %v347
        %v380 = vadd.f32 %v315, %v348
        %v381 = vadd.f32 %v316, %v349
        %v382 = vadd.f32 %v317, %v350
        %v383 = vadd.f32 %v318, %v351
        %v384 = vadd.f32 %v319, %v352
        %v385 = vadd.f32 %v320, %v353
        %v386 = vadd.f32 %v321, %v354
        %v387 = vadd.f32 %v322, %v355
        %v388 = vadd.f32 %v323, %v356
        %v389 = vadd.f32 %v324, %v357
        %v390 = vadd.f32 %v325, %v358
        %v391 = vadd.f32 %v326, %v359
        %v392 = vadd.f32 %v327, %v360
        %v393 = vadd.f32 %v328, %v361
        %v394 = vadd.f32 %v329, %v362
        %v395 = vadd.f32 %v330, %v363
        %v396 = vadd.f32 %v331, %v364
        %v397 = vadd.f32 %v332, %v365
        %v398 = vadd.f32 %v333, %v366
        %v399 = vadd.f32 %v334, %v367
        %v400 = vadd.f32 %v335, %v368
        %v401 = vadd.f32 %v336, %v369
        %v402 = vadd.f32 %v337, %v370
        %v403 = vadd.f32 %v338, %v371
        %v404 = vadd.f32 %v339, %v372
        %s405 = scalar_lea.vmem %s267, 512 [#allocation2]
        %v406 = vld [vmem:[%s405] sm:$0xff]
        %v407 = vld [vmem:[%s405 + $0x8] sm:$0xff]
        %v408 = vld [vmem:[%s405 + $0x10] sm:$0xff]
        %v409 = vld [vmem:[%s405 + $0x18] sm:$0xff]
        %v410 = vld [vmem:[%s405 + $0x20] sm:$0xff]
        %v411 = vld [vmem:[%s405 + $0x28] sm:$0xff]
        %v412 = vld [vmem:[%s405 + $0x30] sm:$0xff]
        %v413 = vld [vmem:[%s405 + $0x38] sm:$0xff]
        %v414 = vld [vmem:[%s405 + $0x40] sm:$0xff]
        %v415 = vld [vmem:[%s405 + $0x48] sm:$0xff]
        %v416 = vld [vmem:[%s405 + $0x50] sm:$0xff]
        %v417 = vld [vmem:[%s405 + $0x58] sm:$0xff]
        %v418 = vld [vmem:[%s405 + $0x60] sm:$0xff]
        %v419 = vld [vmem:[%s405 + $0x68] sm:$0xff]
        %v420 = vld [vmem:[%s405 + $0x70] sm:$0xff]
        %v421 = vld [vmem:[%s405 + $0x78] sm:$0xff]
        %v422 = vld [vmem:[%s405 + $0x80] sm:$0xff]
        %v423 = vld [vmem:[%s405 + $0x88] sm:$0xff]
        %v424 = vld [vmem:[%s405 + $0x90] sm:$0xff]
        %v425 = vld [vmem:[%s405 + $0x98] sm:$0xff]
        %v426 = vld [vmem:[%s405 + $0xa0] sm:$0xff]
        %v427 = vld [vmem:[%s405 + $0xa8] sm:$0xff]
        %v428 = vld [vmem:[%s405 + $0xb0] sm:$0xff]
        %v429 = vld [vmem:[%s405 + $0xb8] sm:$0xff]
        %v430 = vld [vmem:[%s405 + $0xc0] sm:$0xff]
        %v431 = vld [vmem:[%s405 + $0xc8] sm:$0xff]
        %v432 = vld [vmem:[%s405 + $0xd0] sm:$0xff]
        %v433 = vld [vmem:[%s405 + $0xd8] sm:$0xff]
        %v434 = vld [vmem:[%s405 + $0xe0] sm:$0xff]
        %v435 = vld [vmem:[%s405 + $0xe8] sm:$0xff]
        %v436 = vld [vmem:[%s405 + $0xf0] sm:$0xff]
        %v437 = vld [vmem:[%s405 + $0xf8] sm:$0xff]
        %v438 = vadd.f32 %v373, %v406
        %v439 = vadd.f32 %v374, %v407
        %v440 = vadd.f32 %v375, %v408
        %v441 = vadd.f32 %v376, %v409
        %v442 = vadd.f32 %v377, %v410
        %v443 = vadd.f32 %v378, %v411
        %v444 = vadd.f32 %v379, %v412
        %v445 = vadd.f32 %v380, %v413
        %v446 = vadd.f32 %v381, %v414
        %v447 = vadd.f32 %v382, %v415
        %v448 = vadd.f32 %v383, %v416
        %v449 = vadd.f32 %v384, %v417
        %v450 = vadd.f32 %v385, %v418
        %v451 = vadd.f32 %v386, %v419
        %v452 = vadd.f32 %v387, %v420
        %v453 = vadd.f32 %v388, %v421
        %v454 = vadd.f32 %v389, %v422
        %v455 = vadd.f32 %v390, %v423
        %v456 = vadd.f32 %v391, %v424
        %v457 = vadd.f32 %v392, %v425
        %v458 = vadd.f32 %v393, %v426
        %v459 = vadd.f32 %v394, %v427
        %v460 = vadd.f32 %v395, %v428
        %v461 = vadd.f32 %v396, %v429
        %v462 = vadd.f32 %v397, %v430
        %v463 = vadd.f32 %v398, %v431
        %v464 = vadd.f32 %v399, %v432
        %v465 = vadd.f32 %v400, %v433
        %v466 = vadd.f32 %v401, %v434
        %v467 = vadd.f32 %v402, %v435
        %v468 = vadd.f32 %v403, %v436
        %v469 = vadd.f32 %v404, %v437
        %v470 = vmul.f32 %v438, 0.33333334
        %v471 = vmul.f32 %v439, 0.33333334
        %v472 = vmul.f32 %v440, 0.33333334
        %v473 = vmul.f32 %v441, 0.33333334
        %v474 = vmul.f32 %v442, 0.33333334
        %v475 = vmul.f32 %v443, 0.33333334
        %v476 = vmul.f32 %v444, 0.33333334
        %v477 = vmul.f32 %v445, 0.33333334
        %v478 = vmul.f32 %v446, 0.33333334
        %v479 = vmul.f32 %v447, 0.33333334
        %v480 = vmul.f32 %v448, 0.33333334
        %v481 = vmul.f32 %v449, 0.33333334
        %v482 = vmul.f32 %v450, 0.33333334
        %v483 = vmul.f32 %v451, 0.33333334
        %v484 = vmul.f32 %v452, 0.33333334
        %v485 = vmul.f32 %v453, 0.33333334
        %v486 = vmul.f32 %v454, 0.33333334
        %v487 = vmul.f32 %v455, 0.33333334
        %v488 = vmul.f32 %v456, 0.33333334
        %v489 = vmul.f32 %v457, 0.33333334
        %v490 = vmul.f32 %v458, 0.33333334
        %v491 = vmul.f32 %v459, 0.33333334
        %v492 = vmul.f32 %v460, 0.33333334
        %v493 = vmul.f32 %v461, 0.33333334
        %v494 = vmul.f32 %v462, 0.33333334
        %v495 = vmul.f32 %v463, 0.33333334
        %v496 = vmul.f32 %v464, 0.33333334
        %v497 = vmul.f32 %v465, 0.33333334
        %v498 = vmul.f32 %v466, 0.33333334
        %v499 = vmul.f32 %v467, 0.33333334
        %v500 = vmul.f32 %v468, 0.33333334
        %v501 = vmul.f32 %v469, 0.33333334
        %v502 = vld [vmem:[#allocation5] sm:$0xff]
        %v503 = vld [vmem:[#allocation5 + $0x8] sm:$0xff]
        %v506 = vrot.slane %v502, 1
        %v507 = vrot.slane %v502, 2
        %v508 = vrot.slane %v502, 3
        %v509 = vrot.slane %v502, 4
        %v510 = vrot.slane %v502, 5
        %v511 = vrot.slane %v502, 6
        %v512 = vrot.slane %v502, 7
        %v513 = vrot.slane %v503, 1
        %v514 = vrot.slane %v503, 2
        %v515 = vrot.slane %v503, 3
        %v516 = vrot.slane %v503, 4
        %v517 = vrot.slane %v503, 5
        %v518 = vrot.slane %v503, 6
        %v519 = vrot.slane %v503, 7
        %v520 = vperm.slane %v502, 0
        %v521 = vperm.slane %v506, 0
        %v522 = vperm.slane %v507, 0
        %v523 = vperm.slane %v508, 0
        %v524 = vperm.slane %v509, 0
        %v525 = vperm.slane %v510, 0
        %v526 = vperm.slane %v511, 0
        %v527 = vperm.slane %v512, 0
        %v528 = vperm.slane %v503, 0
        %v529 = vperm.slane %v513, 0
        %v530 = vperm.slane %v514, 0
        %v531 = vperm.slane %v515, 0
        %v532 = vperm.slane %v516, 0
        %v533 = vperm.slane %v517, 0
        %v534 = vperm.slane %v518, 0
        %v535 = vperm.slane %v519, 0
        %v552 = vadd.f32 %v470, %v520
        %v553 = vadd.f32 %v471, %v520
        %v554 = vadd.f32 %v472, %v521
        %v555 = vadd.f32 %v473, %v521
        %v556 = vadd.f32 %v474, %v522
        %v557 = vadd.f32 %v475, %v522
        %v558 = vadd.f32 %v476, %v523
        %v559 = vadd.f32 %v477, %v523
        %v560 = vadd.f32 %v478, %v524
        %v561 = vadd.f32 %v479, %v524
        %v562 = vadd.f32 %v480, %v525
        %v563 = vadd.f32 %v481, %v525
        %v564 = vadd.f32 %v482, %v526
        %v565 = vadd.f32 %v483, %v526
        %v566 = vadd.f32 %v484, %v527
        %v567 = vadd.f32 %v485, %v527
        %v568 = vadd.f32 %v486, %v528
        %v569 = vadd.f32 %v487, %v528
        %v570 = vadd.f32 %v488, %v529
        %v571 = vadd.f32 %v489, %v529
        %v572 = vadd.f32 %v490, %v530
        %v573 = vadd.f32 %v491, %v530
        %v574 = vadd.f32 %v492, %v531
        %v575 = vadd.f32 %v493, %v531
        %v576 = vadd.f32 %v494, %v532
        %v577 = vadd.f32 %v495, %v532
        %v578 = vadd.f32 %v496, %v533
        %v579 = vadd.f32 %v497, %v533
        %v580 = vadd.f32 %v498, %v534
        %v581 = vadd.f32 %v499, %v534
        %v582 = vadd.f32 %v500, %v535
        %v583 = vadd.f32 %v501, %v535
        %v584 = vld [vmem:[#allocation7] sm:$0xff]
        %v585 = vld [vmem:[#allocation7 + $0x8] sm:$0xff]
        %v586 = vadd.f32 %v552, %v584
        %v587 = vadd.f32 %v553, %v585
        %v588 = vadd.f32 %v554, %v584
        %v589 = vadd.f32 %v555, %v585
        %v590 = vadd.f32 %v556, %v584
        %v591 = vadd.f32 %v557, %v585
        %v592 = vadd.f32 %v558, %v584
        %v593 = vadd.f32 %v559, %v585
        %v594 = vadd.f32 %v560, %v584
        %v595 = vadd.f32 %v561, %v585
        %v596 = vadd.f32 %v562, %v584
        %v597 = vadd.f32 %v563, %v585
        %v598 = vadd.f32 %v564, %v584
        %v599 = vadd.f32 %v565, %v585
        %v600 = vadd.f32 %v566, %v584
        %v601 = vadd.f32 %v567, %v585
        %v602 = vadd.f32 %v568, %v584
        %v603 = vadd.f32 %v569, %v585
        %v604 = vadd.f32 %v570, %v584
        %v605 = vadd.f32 %v571, %v585
        %v606 = vadd.f32 %v572, %v584
        %v607 = vadd.f32 %v573, %v585
        %v608 = vadd.f32 %v574, %v584
        %v609 = vadd.f32 %v575, %v585
        %v610 = vadd.f32 %v576, %v584
        %v611 = vadd.f32 %v577, %v585
        %v612 = vadd.f32 %v578, %v584
        %v613 = vadd.f32 %v579, %v585
        %v614 = vadd.f32 %v580, %v584
        %v615 = vadd.f32 %v581, %v585
        %v616 = vadd.f32 %v582, %v584
        %v617 = vadd.f32 %v583, %v585
        %618 = vadd.xlane.f32.xlu0 %v586
        %v619 = vpop.xlane.xlu0 %618
        %620 = vadd.xlane.f32.xlu0 %v587
        %v621 = vpop.xlane.xlu0 %620
        %622 = vadd.xlane.f32.xlu0 %v588
        %v623 = vpop.xlane.xlu0 %622
        %624 = vadd.xlane.f32.xlu0 %v589
        %v625 = vpop.xlane.xlu0 %624
        %626 = vadd.xlane.f32.xlu0 %v590
        %v627 = vpop.xlane.xlu0 %626
        %628 = vadd.xlane.f32.xlu0 %v591
        %v629 = vpop.xlane.xlu0 %628
        %630 = vadd.xlane.f32.xlu0 %v592
        %v631 = vpop.xlane.xlu0 %630
        %632 = vadd.xlane.f32.xlu0 %v593
        %v633 = vpop.xlane.xlu0 %632
        %634 = vadd.xlane.f32.xlu0 %v594
        %v635 = vpop.xlane.xlu0 %634
        %636 = vadd.xlane.f32.xlu0 %v595
        %v637 = vpop.xlane.xlu0 %636
        %638 = vadd.xlane.f32.xlu0 %v596
        %v639 = vpop.xlane.xlu0 %638
        %640 = vadd.xlane.f32.xlu0 %v597
        %v641 = vpop.xlane.xlu0 %640
        %642 = vadd.xlane.f32.xlu0 %v598
        %v643 = vpop.xlane.xlu0 %642
        %644 = vadd.xlane.f32.xlu0 %v599
        %v645 = vpop.xlane.xlu0 %644
        %646 = vadd.xlane.f32.xlu0 %v600
        %v647 = vpop.xlane.xlu0 %646
        %648 = vadd.xlane.f32.xlu0 %v601
        %v649 = vpop.xlane.xlu0 %648
        %650 = vadd.xlane.f32.xlu0 %v602
        %v651 = vpop.xlane.xlu0 %650
        %652 = vadd.xlane.f32.xlu0 %v603
        %v653 = vpop.xlane.xlu0 %652
        %654 = vadd.xlane.f32.xlu0 %v604
        %v655 = vpop.xlane.xlu0 %654
        %656 = vadd.xlane.f32.xlu0 %v605
        %v657 = vpop.xlane.xlu0 %656
        %658 = vadd.xlane.f32.xlu0 %v606
        %v659 = vpop.xlane.xlu0 %658
        %660 = vadd.xlane.f32.xlu0 %v607
        %v661 = vpop.xlane.xlu0 %660
        %662 = vadd.xlane.f32.xlu0 %v608
        %v663 = vpop.xlane.xlu0 %662
        %664 = vadd.xlane.f32.xlu0 %v609
        %v665 = vpop.xlane.xlu0 %664
        %666 = vadd.xlane.f32.xlu0 %v610
        %v667 = vpop.xlane.xlu0 %666
        %668 = vadd.xlane.f32.xlu0 %v611
        %v669 = vpop.xlane.xlu0 %668
        %670 = vadd.xlane.f32.xlu0 %v612
        %v671 = vpop.xlane.xlu0 %670
        %672 = vadd.xlane.f32.xlu0 %v613
        %v673 = vpop.xlane.xlu0 %672
        %674 = vadd.xlane.f32.xlu0 %v614
        %v675 = vpop.xlane.xlu0 %674
        %676 = vadd.xlane.f32.xlu0 %v615
        %v677 = vpop.xlane.xlu0 %676
        %678 = vadd.xlane.f32.xlu0 %v616
        %v679 = vpop.xlane.xlu0 %678
        %680 = vadd.xlane.f32.xlu0 %v617
        %v681 = vpop.xlane.xlu0 %680
        %v682 = vmul.f32 %v586, %v586
        %v683 = vmul.f32 %v587, %v587
        %v684 = vmul.f32 %v588, %v588
        %v685 = vmul.f32 %v589, %v589
        %v686 = vmul.f32 %v590, %v590
        %v687 = vmul.f32 %v591, %v591
        %v688 = vmul.f32 %v592, %v592
        %v689 = vmul.f32 %v593, %v593
        %v690 = vmul.f32 %v594, %v594
        %v691 = vmul.f32 %v595, %v595
        %v692 = vmul.f32 %v596, %v596
        %v693 = vmul.f32 %v597, %v597
        %v694 = vmul.f32 %v598, %v598
        %v695 = vmul.f32 %v599, %v599
        %v696 = vmul.f32 %v600, %v600
        %v697 = vmul.f32 %v601, %v601
        %v698 = vmul.f32 %v602, %v602
        %v699 = vmul.f32 %v603, %v603
        %v700 = vmul.f32 %v604, %v604
        %v701 = vmul.f32 %v605, %v605
        %v702 = vmul.f32 %v606, %v606
        %v703 = vmul.f32 %v607, %v607
        %v704 = vmul.f32 %v608, %v608
        %v705 = vmul.f32 %v609, %v609
        %v706 = vmul.f32 %v610, %v610
        %v707 = vmul.f32 %v611, %v611
        %v708 = vmul.f32 %v612, %v612
        %v709 = vmul.f32 %v613, %v613
        %v710 = vmul.f32 %v614, %v614
        %v711 = vmul.f32 %v615, %v615
        %v712 = vmul.f32 %v616, %v616
        %v713 = vmul.f32 %v617, %v617
        %714 = vadd.xlane.f32.xlu0 %v682
        %v715 = vpop.xlane.xlu0 %714
        %716 = vadd.xlane.f32.xlu0 %v683
        %v717 = vpop.xlane.xlu0 %716
        %718 = vadd.xlane.f32.xlu0 %v684
        %v719 = vpop.xlane.xlu0 %718
        %720 = vadd.xlane.f32.xlu0 %v685
        %v721 = vpop.xlane.xlu0 %720
        %722 = vadd.xlane.f32.xlu0 %v686
        %v723 = vpop.xlane.xlu0 %722
        %724 = vadd.xlane.f32.xlu0 %v687
        %v725 = vpop.xlane.xlu0 %724
        %726 = vadd.xlane.f32.xlu0 %v688
        %v727 = vpop.xlane.xlu0 %726
        %728 = vadd.xlane.f32.xlu0 %v689
        %v729 = vpop.xlane.xlu0 %728
        %730 = vadd.xlane.f32.xlu0 %v690
        %v731 = vpop.xlane.xlu0 %730
        %732 = vadd.xlane.f32.xlu0 %v691
        %v733 = vpop.xlane.xlu0 %732
        %734 = vadd.xlane.f32.xlu0 %v692
        %v735 = vpop.xlane.xlu0 %734
        %736 = vadd.xlane.f32.xlu0 %v693
        %v737 = vpop.xlane.xlu0 %736
        %738 = vadd.xlane.f32.xlu0 %v694
        %v739 = vpop.xlane.xlu0 %738
        %740 = vadd.xlane.f32.xlu0 %v695
        %v741 = vpop.xlane.xlu0 %740
        %742 = vadd.xlane.f32.xlu0 %v696
        %v743 = vpop.xlane.xlu0 %742
        %744 = vadd.xlane.f32.xlu0 %v697
        %v745 = vpop.xlane.xlu0 %744
        %746 = vadd.xlane.f32.xlu0 %v698
        %v747 = vpop.xlane.xlu0 %746
        %748 = vadd.xlane.f32.xlu0 %v699
        %v749 = vpop.xlane.xlu0 %748
        %750 = vadd.xlane.f32.xlu0 %v700
        %v751 = vpop.xlane.xlu0 %750
        %752 = vadd.xlane.f32.xlu0 %v701
        %v753 = vpop.xlane.xlu0 %752
        %754 = vadd.xlane.f32.xlu0 %v702
        %v755 = vpop.xlane.xlu0 %754
        %756 = vadd.xlane.f32.xlu0 %v703
        %v757 = vpop.xlane.xlu0 %756
        %758 = vadd.xlane.f32.xlu0 %v704
        %v759 = vpop.xlane.xlu0 %758
        %760 = vadd.xlane.f32.xlu0 %v705
        %v761 = vpop.xlane.xlu0 %760
        %762 = vadd.xlane.f32.xlu0 %v706
        %v763 = vpop.xlane.xlu0 %762
        %764 = vadd.xlane.f32.xlu0 %v707
        %v765 = vpop.xlane.xlu0 %764
        %766 = vadd.xlane.f32.xlu0 %v708
        %v767 = vpop.xlane.xlu0 %766
        %768 = vadd.xlane.f32.xlu0 %v709
        %v769 = vpop.xlane.xlu0 %768
        %770 = vadd.xlane.f32.xlu0 %v710
        %v771 = vpop.xlane.xlu0 %770
        %772 = vadd.xlane.f32.xlu0 %v711
        %v773 = vpop.xlane.xlu0 %772
        %774 = vadd.xlane.f32.xlu0 %v712
        %v775 = vpop.xlane.xlu0 %774
        %776 = vadd.xlane.f32.xlu0 %v713
        %v777 = vpop.xlane.xlu0 %776
        %v778 = vmul.f32 %v619, 0.0078125
        %v779 = vmul.f32 %v621, 0.0078125
        %v780 = vmul.f32 %v623, 0.0078125
        %v781 = vmul.f32 %v625, 0.0078125
        %v782 = vmul.f32 %v627, 0.0078125
        %v783 = vmul.f32 %v629, 0.0078125
        %v784 = vmul.f32 %v631, 0.0078125
        %v785 = vmul.f32 %v633, 0.0078125
        %v786 = vmul.f32 %v635, 0.0078125
        %v787 = vmul.f32 %v637, 0.0078125
        %v788 = vmul.f32 %v639, 0.0078125
        %v789 = vmul.f32 %v641, 0.0078125
        %v790 = vmul.f32 %v643, 0.0078125
        %v791 = vmul.f32 %v645, 0.0078125
        %v792 = vmul.f32 %v647, 0.0078125
        %v793 = vmul.f32 %v649, 0.0078125
        %v794 = vmul.f32 %v651, 0.0078125
        %v795 = vmul.f32 %v653, 0.0078125
        %v796 = vmul.f32 %v655, 0.0078125
        %v797 = vmul.f32 %v657, 0.0078125
        %v798 = vmul.f32 %v659, 0.0078125
        %v799 = vmul.f32 %v661, 0.0078125
        %v800 = vmul.f32 %v663, 0.0078125
        %v801 = vmul.f32 %v665, 0.0078125
        %v802 = vmul.f32 %v667, 0.0078125
        %v803 = vmul.f32 %v669, 0.0078125
        %v804 = vmul.f32 %v671, 0.0078125
        %v805 = vmul.f32 %v673, 0.0078125
        %v806 = vmul.f32 %v675, 0.0078125
        %v807 = vmul.f32 %v677, 0.0078125
        %v808 = vmul.f32 %v679, 0.0078125
        %v809 = vmul.f32 %v681, 0.0078125
        %v810 = vmul.f32 %v715, 0.0078125
        %v811 = vmul.f32 %v717, 0.0078125
        %v812 = vmul.f32 %v719, 0.0078125
        %v813 = vmul.f32 %v721, 0.0078125
        %v814 = vmul.f32 %v723, 0.0078125
        %v815 = vmul.f32 %v725, 0.0078125
        %v816 = vmul.f32 %v727, 0.0078125
        %v817 = vmul.f32 %v729, 0.0078125
        %v818 = vmul.f32 %v731, 0.0078125
        %v819 = vmul.f32 %v733, 0.0078125
        %v820 = vmul.f32 %v735, 0.0078125
        %v821 = vmul.f32 %v737, 0.0078125
        %v822 = vmul.f32 %v739, 0.0078125
        %v823 = vmul.f32 %v741, 0.0078125
        %v824 = vmul.f32 %v743, 0.0078125
        %v825 = vmul.f32 %v745, 0.0078125
        %v826 = vmul.f32 %v747, 0.0078125
        %v827 = vmul.f32 %v749, 0.0078125
        %v828 = vmul.f32 %v751, 0.0078125
        %v829 = vmul.f32 %v753, 0.0078125
        %v830 = vmul.f32 %v755, 0.0078125
        %v831 = vmul.f32 %v757, 0.0078125
        %v832 = vmul.f32 %v759, 0.0078125
        %v833 = vmul.f32 %v761, 0.0078125
        %v834 = vmul.f32 %v763, 0.0078125
        %v835 = vmul.f32 %v765, 0.0078125
        %v836 = vmul.f32 %v767, 0.0078125
        %v837 = vmul.f32 %v769, 0.0078125
        %v838 = vmul.f32 %v771, 0.0078125
        %v839 = vmul.f32 %v773, 0.0078125
        %v840 = vmul.f32 %v775, 0.0078125
        %v841 = vmul.f32 %v777, 0.0078125
        %v842 = vmul.f32 %v778, %v778
        %v843 = vmul.f32 %v779, %v779
        %v844 = vmul.f32 %v780, %v780
        %v845 = vmul.f32 %v781, %v781
        %v846 = vmul.f32 %v782, %v782
        %v847 = vmul.f32 %v783, %v783
        %v848 = vmul.f32 %v784, %v784
        %v849 = vmul.f32 %v785, %v785
        %v850 = vmul.f32 %v786, %v786
        %v851 = vmul.f32 %v787, %v787
        %v852 = vmul.f32 %v788, %v788
        %v853 = vmul.f32 %v789, %v789
        %v854 = vmul.f32 %v790, %v790
        %v855 = vmul.f32 %v791, %v791
        %v856 = vmul.f32 %v792, %v792
        %v857 = vmul.f32 %v793, %v793
        %v858 = vmul.f32 %v794, %v794
        %v859 = vmul.f32 %v795, %v795
        %v860 = vmul.f32 %v796, %v796
        %v861 = vmul.f32 %v797, %v797
        %v862 = vmul.f32 %v798, %v798
        %v863 = vmul.f32 %v799, %v799
        %v864 = vmul.f32 %v800, %v800
        %v865 = vmul.f32 %v801, %v801
        %v866 = vmul.f32 %v802, %v802
        %v867 = vmul.f32 %v803, %v803
        %v868 = vmul.f32 %v804, %v804
        %v869 = vmul.f32 %v805, %v805
        %v870 = vmul.f32 %v806, %v806
        %v871 = vmul.f32 %v807, %v807
        %v872 = vmul.f32 %v808, %v808
        %v873 = vmul.f32 %v809, %v809
        %v874 = vsub.f32 %v810, %v842
        %v875 = vsub.f32 %v811, %v843
        %v876 = vsub.f32 %v812, %v844
        %v877 = vsub.f32 %v813, %v845
        %v878 = vsub.f32 %v814, %v846
        %v879 = vsub.f32 %v815, %v847
        %v880 = vsub.f32 %v816, %v848
        %v881 = vsub.f32 %v817, %v849
        %v882 = vsub.f32 %v818, %v850
        %v883 = vsub.f32 %v819, %v851
        %v884 = vsub.f32 %v820, %v852
        %v885 = vsub.f32 %v821, %v853
        %v886 = vsub.f32 %v822, %v854
        %v887 = vsub.f32 %v823, %v855
        %v888 = vsub.f32 %v824, %v856
        %v889 = vsub.f32 %v825, %v857
        %v890 = vsub.f32 %v826, %v858
        %v891 = vsub.f32 %v827, %v859
        %v892 = vsub.f32 %v828, %v860
        %v893 = vsub.f32 %v829, %v861
        %v894 = vsub.f32 %v830, %v862
        %v895 = vsub.f32 %v831, %v863
        %v896 = vsub.f32 %v832, %v864
        %v897 = vsub.f32 %v833, %v865
        %v898 = vsub.f32 %v834, %v866
        %v899 = vsub.f32 %v835, %v867
        %v900 = vsub.f32 %v836, %v868
        %v901 = vsub.f32 %v837, %v869
        %v902 = vsub.f32 %v838, %v870
        %v903 = vsub.f32 %v839, %v871
        %v904 = vsub.f32 %v840, %v872
        %v905 = vsub.f32 %v841, %v873
        %v906 = vmax.f32 %v874, 0.0
        %v907 = vmax.f32 %v875, 0.0
        %v908 = vmax.f32 %v876, 0.0
        %v909 = vmax.f32 %v877, 0.0
        %v910 = vmax.f32 %v878, 0.0
        %v911 = vmax.f32 %v879, 0.0
        %v912 = vmax.f32 %v880, 0.0
        %v913 = vmax.f32 %v881, 0.0
        %v914 = vmax.f32 %v882, 0.0
        %v915 = vmax.f32 %v883, 0.0
        %v916 = vmax.f32 %v884, 0.0
        %v917 = vmax.f32 %v885, 0.0
        %v918 = vmax.f32 %v886, 0.0
        %v919 = vmax.f32 %v887, 0.0
        %v920 = vmax.f32 %v888, 0.0
        %v921 = vmax.f32 %v889, 0.0
        %v922 = vmax.f32 %v890, 0.0
        %v923 = vmax.f32 %v891, 0.0
        %v924 = vmax.f32 %v892, 0.0
        %v925 = vmax.f32 %v893, 0.0
        %v926 = vmax.f32 %v894, 0.0
        %v927 = vmax.f32 %v895, 0.0
        %v928 = vmax.f32 %v896, 0.0
        %v929 = vmax.f32 %v897, 0.0
        %v930 = vmax.f32 %v898, 0.0
        %v931 = vmax.f32 %v899, 0.0
        %v932 = vmax.f32 %v900, 0.0
        %v933 = vmax.f32 %v901, 0.0
        %v934 = vmax.f32 %v902, 0.0
        %v935 = vmax.f32 %v903, 0.0
        %v936 = vmax.f32 %v904, 0.0
        %v937 = vmax.f32 %v905, 0.0
        %v938 = vsub.f32 %v586, %v778
        %v939 = vsub.f32 %v587, %v779
        %v940 = vsub.f32 %v588, %v780
        %v941 = vsub.f32 %v589, %v781
        %v942 = vsub.f32 %v590, %v782
        %v943 = vsub.f32 %v591, %v783
        %v944 = vsub.f32 %v592, %v784
        %v945 = vsub.f32 %v593, %v785
        %v946 = vsub.f32 %v594, %v786
        %v947 = vsub.f32 %v595, %v787
        %v948 = vsub.f32 %v596, %v788
        %v949 = vsub.f32 %v597, %v789
        %v950 = vsub.f32 %v598, %v790
        %v951 = vsub.f32 %v599, %v791
        %v952 = vsub.f32 %v600, %v792
        %v953 = vsub.f32 %v601, %v793
        %v954 = vsub.f32 %v602, %v794
        %v955 = vsub.f32 %v603, %v795
        %v956 = vsub.f32 %v604, %v796
        %v957 = vsub.f32 %v605, %v797
        %v958 = vsub.f32 %v606, %v798
        %v959 = vsub.f32 %v607, %v799
        %v960 = vsub.f32 %v608, %v800
        %v961 = vsub.f32 %v609, %v801
        %v962 = vsub.f32 %v610, %v802
        %v963 = vsub.f32 %v611, %v803
        %v964 = vsub.f32 %v612, %v804
        %v965 = vsub.f32 %v613, %v805
        %v966 = vsub.f32 %v614, %v806
        %v967 = vsub.f32 %v615, %v807
        %v968 = vsub.f32 %v616, %v808
        %v969 = vsub.f32 %v617, %v809
        %v970 = vadd.f32 %v906, 1e-12
        %v971 = vadd.f32 %v907, 1e-12
        %v972 = vadd.f32 %v908, 1e-12
        %v973 = vadd.f32 %v909, 1e-12
        %v974 = vadd.f32 %v910, 1e-12
        %v975 = vadd.f32 %v911, 1e-12
        %v976 = vadd.f32 %v912, 1e-12
        %v977 = vadd.f32 %v913, 1e-12
        %v978 = vadd.f32 %v914, 1e-12
        %v979 = vadd.f32 %v915, 1e-12
        %v980 = vadd.f32 %v916, 1e-12
        %v981 = vadd.f32 %v917, 1e-12
        %v982 = vadd.f32 %v918, 1e-12
        %v983 = vadd.f32 %v919, 1e-12
        %v984 = vadd.f32 %v920, 1e-12
        %v985 = vadd.f32 %v921, 1e-12
        %v986 = vadd.f32 %v922, 1e-12
        %v987 = vadd.f32 %v923, 1e-12
        %v988 = vadd.f32 %v924, 1e-12
        %v989 = vadd.f32 %v925, 1e-12
        %v990 = vadd.f32 %v926, 1e-12
        %v991 = vadd.f32 %v927, 1e-12
        %v992 = vadd.f32 %v928, 1e-12
        %v993 = vadd.f32 %v929, 1e-12
        %v994 = vadd.f32 %v930, 1e-12
        %v995 = vadd.f32 %v931, 1e-12
        %v996 = vadd.f32 %v932, 1e-12
        %v997 = vadd.f32 %v933, 1e-12
        %v998 = vadd.f32 %v934, 1e-12
        %v999 = vadd.f32 %v935, 1e-12
        %v1000 = vadd.f32 %v936, 1e-12
        %v1001 = vadd.f32 %v937, 1e-12
        %v1002 = vrsqrt.pop %v970
        %v1003 = vmul.f32 %v1002, %v970
        %v1004 = vmul.f32 %v1003, %v1002
        %v1005 = vmul.f32 0.5, %v1004
        %v1006 = vsub.f32 1.5, %v1005
        %v1007 = vmul.f32 %v1002, %v1006
        %vm1008 = vweird.f32 %v970
        %vm1009 = vweird.f32 %v1002
        %vm1010 = vmor %vm1008, %vm1009
        %v1011 = vsel %vm1010, %v1002, %v1007
        %v1012 = vrsqrt.pop %v971
        %v1013 = vmul.f32 %v1012, %v971
        %v1014 = vmul.f32 %v1013, %v1012
        %v1015 = vmul.f32 0.5, %v1014
        %v1016 = vsub.f32 1.5, %v1015
        %v1017 = vmul.f32 %v1012, %v1016
        %vm1018 = vweird.f32 %v971
        %vm1019 = vweird.f32 %v1012
        %vm1020 = vmor %vm1018, %vm1019
        %v1021 = vsel %vm1020, %v1012, %v1017
        %v1022 = vrsqrt.pop %v972
        %v1023 = vmul.f32 %v1022, %v972
        %v1024 = vmul.f32 %v1023, %v1022
        %v1025 = vmul.f32 0.5, %v1024
        %v1026 = vsub.f32 1.5, %v1025
        %v1027 = vmul.f32 %v1022, %v1026
        %vm1028 = vweird.f32 %v972
        %vm1029 = vweird.f32 %v1022
        %vm1030 = vmor %vm1028, %vm1029
        %v1031 = vsel %vm1030, %v1022, %v1027
        %v1032 = vrsqrt.pop %v973
        %v1033 = vmul.f32 %v1032, %v973
        %v1034 = vmul.f32 %v1033, %v1032
        %v1035 = vmul.f32 0.5, %v1034
        %v1036 = vsub.f32 1.5, %v1035
        %v1037 = vmul.f32 %v1032, %v1036
        %vm1038 = vweird.f32 %v973
        %vm1039 = vweird.f32 %v1032
        %vm1040 = vmor %vm1038, %vm1039
        %v1041 = vsel %vm1040, %v1032, %v1037
        %v1042 = vrsqrt.pop %v974
        %v1043 = vmul.f32 %v1042, %v974
        %v1044 = vmul.f32 %v1043, %v1042
        %v1045 = vmul.f32 0.5, %v1044
        %v1046 = vsub.f32 1.5, %v1045
        %v1047 = vmul.f32 %v1042, %v1046
        %vm1048 = vweird.f32 %v974
        %vm1049 = vweird.f32 %v1042
        %vm1050 = vmor %vm1048, %vm1049
        %v1051 = vsel %vm1050, %v1042, %v1047
        %v1052 = vrsqrt.pop %v975
        %v1053 = vmul.f32 %v1052, %v975
        %v1054 = vmul.f32 %v1053, %v1052
        %v1055 = vmul.f32 0.5, %v1054
        %v1056 = vsub.f32 1.5, %v1055
        %v1057 = vmul.f32 %v1052, %v1056
        %vm1058 = vweird.f32 %v975
        %vm1059 = vweird.f32 %v1052
        %vm1060 = vmor %vm1058, %vm1059
        %v1061 = vsel %vm1060, %v1052, %v1057
        %v1062 = vrsqrt.pop %v976
        %v1063 = vmul.f32 %v1062, %v976
        %v1064 = vmul.f32 %v1063, %v1062
        %v1065 = vmul.f32 0.5, %v1064
        %v1066 = vsub.f32 1.5, %v1065
        %v1067 = vmul.f32 %v1062, %v1066
        %vm1068 = vweird.f32 %v976
        %vm1069 = vweird.f32 %v1062
        %vm1070 = vmor %vm1068, %vm1069
        %v1071 = vsel %vm1070, %v1062, %v1067
        %v1072 = vrsqrt.pop %v977
        %v1073 = vmul.f32 %v1072, %v977
        %v1074 = vmul.f32 %v1073, %v1072
        %v1075 = vmul.f32 0.5, %v1074
        %v1076 = vsub.f32 1.5, %v1075
        %v1077 = vmul.f32 %v1072, %v1076
        %vm1078 = vweird.f32 %v977
        %vm1079 = vweird.f32 %v1072
        %vm1080 = vmor %vm1078, %vm1079
        %v1081 = vsel %vm1080, %v1072, %v1077
        %v1082 = vrsqrt.pop %v978
        %v1083 = vmul.f32 %v1082, %v978
        %v1084 = vmul.f32 %v1083, %v1082
        %v1085 = vmul.f32 0.5, %v1084
        %v1086 = vsub.f32 1.5, %v1085
        %v1087 = vmul.f32 %v1082, %v1086
        %vm1088 = vweird.f32 %v978
        %vm1089 = vweird.f32 %v1082
        %vm1090 = vmor %vm1088, %vm1089
        %v1091 = vsel %vm1090, %v1082, %v1087
        %v1092 = vrsqrt.pop %v979
        %v1093 = vmul.f32 %v1092, %v979
        %v1094 = vmul.f32 %v1093, %v1092
        %v1095 = vmul.f32 0.5, %v1094
        %v1096 = vsub.f32 1.5, %v1095
        %v1097 = vmul.f32 %v1092, %v1096
        %vm1098 = vweird.f32 %v979
        %vm1099 = vweird.f32 %v1092
        %vm1100 = vmor %vm1098, %vm1099
        %v1101 = vsel %vm1100, %v1092, %v1097
        %v1102 = vrsqrt.pop %v980
        %v1103 = vmul.f32 %v1102, %v980
        %v1104 = vmul.f32 %v1103, %v1102
        %v1105 = vmul.f32 0.5, %v1104
        %v1106 = vsub.f32 1.5, %v1105
        %v1107 = vmul.f32 %v1102, %v1106
        %vm1108 = vweird.f32 %v980
        %vm1109 = vweird.f32 %v1102
        %vm1110 = vmor %vm1108, %vm1109
        %v1111 = vsel %vm1110, %v1102, %v1107
        %v1112 = vrsqrt.pop %v981
        %v1113 = vmul.f32 %v1112, %v981
        %v1114 = vmul.f32 %v1113, %v1112
        %v1115 = vmul.f32 0.5, %v1114
        %v1116 = vsub.f32 1.5, %v1115
        %v1117 = vmul.f32 %v1112, %v1116
        %vm1118 = vweird.f32 %v981
        %vm1119 = vweird.f32 %v1112
        %vm1120 = vmor %vm1118, %vm1119
        %v1121 = vsel %vm1120, %v1112, %v1117
        %v1122 = vrsqrt.pop %v982
        %v1123 = vmul.f32 %v1122, %v982
        %v1124 = vmul.f32 %v1123, %v1122
        %v1125 = vmul.f32 0.5, %v1124
        %v1126 = vsub.f32 1.5, %v1125
        %v1127 = vmul.f32 %v1122, %v1126
        %vm1128 = vweird.f32 %v982
        %vm1129 = vweird.f32 %v1122
        %vm1130 = vmor %vm1128, %vm1129
        %v1131 = vsel %vm1130, %v1122, %v1127
        %v1132 = vrsqrt.pop %v983
        %v1133 = vmul.f32 %v1132, %v983
        %v1134 = vmul.f32 %v1133, %v1132
        %v1135 = vmul.f32 0.5, %v1134
        %v1136 = vsub.f32 1.5, %v1135
        %v1137 = vmul.f32 %v1132, %v1136
        %vm1138 = vweird.f32 %v983
        %vm1139 = vweird.f32 %v1132
        %vm1140 = vmor %vm1138, %vm1139
        %v1141 = vsel %vm1140, %v1132, %v1137
        %v1142 = vrsqrt.pop %v984
        %v1143 = vmul.f32 %v1142, %v984
        %v1144 = vmul.f32 %v1143, %v1142
        %v1145 = vmul.f32 0.5, %v1144
        %v1146 = vsub.f32 1.5, %v1145
        %v1147 = vmul.f32 %v1142, %v1146
        %vm1148 = vweird.f32 %v984
        %vm1149 = vweird.f32 %v1142
        %vm1150 = vmor %vm1148, %vm1149
        %v1151 = vsel %vm1150, %v1142, %v1147
        %v1152 = vrsqrt.pop %v985
        %v1153 = vmul.f32 %v1152, %v985
        %v1154 = vmul.f32 %v1153, %v1152
        %v1155 = vmul.f32 0.5, %v1154
        %v1156 = vsub.f32 1.5, %v1155
        %v1157 = vmul.f32 %v1152, %v1156
        %vm1158 = vweird.f32 %v985
        %vm1159 = vweird.f32 %v1152
        %vm1160 = vmor %vm1158, %vm1159
        %v1161 = vsel %vm1160, %v1152, %v1157
        %v1162 = vrsqrt.pop %v986
        %v1163 = vmul.f32 %v1162, %v986
        %v1164 = vmul.f32 %v1163, %v1162
        %v1165 = vmul.f32 0.5, %v1164
        %v1166 = vsub.f32 1.5, %v1165
        %v1167 = vmul.f32 %v1162, %v1166
        %vm1168 = vweird.f32 %v986
        %vm1169 = vweird.f32 %v1162
        %vm1170 = vmor %vm1168, %vm1169
        %v1171 = vsel %vm1170, %v1162, %v1167
        %v1172 = vrsqrt.pop %v987
        %v1173 = vmul.f32 %v1172, %v987
        %v1174 = vmul.f32 %v1173, %v1172
        %v1175 = vmul.f32 0.5, %v1174
        %v1176 = vsub.f32 1.5, %v1175
        %v1177 = vmul.f32 %v1172, %v1176
        %vm1178 = vweird.f32 %v987
        %vm1179 = vweird.f32 %v1172
        %vm1180 = vmor %vm1178, %vm1179
        %v1181 = vsel %vm1180, %v1172, %v1177
        %v1182 = vrsqrt.pop %v988
        %v1183 = vmul.f32 %v1182, %v988
        %v1184 = vmul.f32 %v1183, %v1182
        %v1185 = vmul.f32 0.5, %v1184
        %v1186 = vsub.f32 1.5, %v1185
        %v1187 = vmul.f32 %v1182, %v1186
        %vm1188 = vweird.f32 %v988
        %vm1189 = vweird.f32 %v1182
        %vm1190 = vmor %vm1188, %vm1189
        %v1191 = vsel %vm1190, %v1182, %v1187
        %v1192 = vrsqrt.pop %v989
        %v1193 = vmul.f32 %v1192, %v989
        %v1194 = vmul.f32 %v1193, %v1192
        %v1195 = vmul.f32 0.5, %v1194
        %v1196 = vsub.f32 1.5, %v1195
        %v1197 = vmul.f32 %v1192, %v1196
        %vm1198 = vweird.f32 %v989
        %vm1199 = vweird.f32 %v1192
        %vm1200 = vmor %vm1198, %vm1199
        %v1201 = vsel %vm1200, %v1192, %v1197
        %v1202 = vrsqrt.pop %v990
        %v1203 = vmul.f32 %v1202, %v990
        %v1204 = vmul.f32 %v1203, %v1202
        %v1205 = vmul.f32 0.5, %v1204
        %v1206 = vsub.f32 1.5, %v1205
        %v1207 = vmul.f32 %v1202, %v1206
        %vm1208 = vweird.f32 %v990
        %vm1209 = vweird.f32 %v1202
        %vm1210 = vmor %vm1208, %vm1209
        %v1211 = vsel %vm1210, %v1202, %v1207
        %v1212 = vrsqrt.pop %v991
        %v1213 = vmul.f32 %v1212, %v991
        %v1214 = vmul.f32 %v1213, %v1212
        %v1215 = vmul.f32 0.5, %v1214
        %v1216 = vsub.f32 1.5, %v1215
        %v1217 = vmul.f32 %v1212, %v1216
        %vm1218 = vweird.f32 %v991
        %vm1219 = vweird.f32 %v1212
        %vm1220 = vmor %vm1218, %vm1219
        %v1221 = vsel %vm1220, %v1212, %v1217
        %v1222 = vrsqrt.pop %v992
        %v1223 = vmul.f32 %v1222, %v992
        %v1224 = vmul.f32 %v1223, %v1222
        %v1225 = vmul.f32 0.5, %v1224
        %v1226 = vsub.f32 1.5, %v1225
        %v1227 = vmul.f32 %v1222, %v1226
        %vm1228 = vweird.f32 %v992
        %vm1229 = vweird.f32 %v1222
        %vm1230 = vmor %vm1228, %vm1229
        %v1231 = vsel %vm1230, %v1222, %v1227
        %v1232 = vrsqrt.pop %v993
        %v1233 = vmul.f32 %v1232, %v993
        %v1234 = vmul.f32 %v1233, %v1232
        %v1235 = vmul.f32 0.5, %v1234
        %v1236 = vsub.f32 1.5, %v1235
        %v1237 = vmul.f32 %v1232, %v1236
        %vm1238 = vweird.f32 %v993
        %vm1239 = vweird.f32 %v1232
        %vm1240 = vmor %vm1238, %vm1239
        %v1241 = vsel %vm1240, %v1232, %v1237
        %v1242 = vrsqrt.pop %v994
        %v1243 = vmul.f32 %v1242, %v994
        %v1244 = vmul.f32 %v1243, %v1242
        %v1245 = vmul.f32 0.5, %v1244
        %v1246 = vsub.f32 1.5, %v1245
        %v1247 = vmul.f32 %v1242, %v1246
        %vm1248 = vweird.f32 %v994
        %vm1249 = vweird.f32 %v1242
        %vm1250 = vmor %vm1248, %vm1249
        %v1251 = vsel %vm1250, %v1242, %v1247
        %v1252 = vrsqrt.pop %v995
        %v1253 = vmul.f32 %v1252, %v995
        %v1254 = vmul.f32 %v1253, %v1252
        %v1255 = vmul.f32 0.5, %v1254
        %v1256 = vsub.f32 1.5, %v1255
        %v1257 = vmul.f32 %v1252, %v1256
        %vm1258 = vweird.f32 %v995
        %vm1259 = vweird.f32 %v1252
        %vm1260 = vmor %vm1258, %vm1259
        %v1261 = vsel %vm1260, %v1252, %v1257
        %v1262 = vrsqrt.pop %v996
        %v1263 = vmul.f32 %v1262, %v996
        %v1264 = vmul.f32 %v1263, %v1262
        %v1265 = vmul.f32 0.5, %v1264
        %v1266 = vsub.f32 1.5, %v1265
        %v1267 = vmul.f32 %v1262, %v1266
        %vm1268 = vweird.f32 %v996
        %vm1269 = vweird.f32 %v1262
        %vm1270 = vmor %vm1268, %vm1269
        %v1271 = vsel %vm1270, %v1262, %v1267
        %v1272 = vrsqrt.pop %v997
        %v1273 = vmul.f32 %v1272, %v997
        %v1274 = vmul.f32 %v1273, %v1272
        %v1275 = vmul.f32 0.5, %v1274
        %v1276 = vsub.f32 1.5, %v1275
        %v1277 = vmul.f32 %v1272, %v1276
        %vm1278 = vweird.f32 %v997
        %vm1279 = vweird.f32 %v1272
        %vm1280 = vmor %vm1278, %vm1279
        %v1281 = vsel %vm1280, %v1272, %v1277
        %v1282 = vrsqrt.pop %v998
        %v1283 = vmul.f32 %v1282, %v998
        %v1284 = vmul.f32 %v1283, %v1282
        %v1285 = vmul.f32 0.5, %v1284
        %v1286 = vsub.f32 1.5, %v1285
        %v1287 = vmul.f32 %v1282, %v1286
        %vm1288 = vweird.f32 %v998
        %vm1289 = vweird.f32 %v1282
        %vm1290 = vmor %vm1288, %vm1289
        %v1291 = vsel %vm1290, %v1282, %v1287
        %v1292 = vrsqrt.pop %v999
        %v1293 = vmul.f32 %v1292, %v999
        %v1294 = vmul.f32 %v1293, %v1292
        %v1295 = vmul.f32 0.5, %v1294
        %v1296 = vsub.f32 1.5, %v1295
        %v1297 = vmul.f32 %v1292, %v1296
        %vm1298 = vweird.f32 %v999
        %vm1299 = vweird.f32 %v1292
        %vm1300 = vmor %vm1298, %vm1299
        %v1301 = vsel %vm1300, %v1292, %v1297
        %v1302 = vrsqrt.pop %v1000
        %v1303 = vmul.f32 %v1302, %v1000
        %v1304 = vmul.f32 %v1303, %v1302
        %v1305 = vmul.f32 0.5, %v1304
        %v1306 = vsub.f32 1.5, %v1305
        %v1307 = vmul.f32 %v1302, %v1306
        %vm1308 = vweird.f32 %v1000
        %vm1309 = vweird.f32 %v1302
        %vm1310 = vmor %vm1308, %vm1309
        %v1311 = vsel %vm1310, %v1302, %v1307
        %v1312 = vrsqrt.pop %v1001
        %v1313 = vmul.f32 %v1312, %v1001
        %v1314 = vmul.f32 %v1313, %v1312
        %v1315 = vmul.f32 0.5, %v1314
        %v1316 = vsub.f32 1.5, %v1315
        %v1317 = vmul.f32 %v1312, %v1316
        %vm1318 = vweird.f32 %v1001
        %vm1319 = vweird.f32 %v1312
        %vm1320 = vmor %vm1318, %vm1319
        %v1321 = vsel %vm1320, %v1312, %v1317
        %v1322 = vmul.f32 %v938, %v1011
        %v1323 = vmul.f32 %v939, %v1021
        %v1324 = vmul.f32 %v940, %v1031
        %v1325 = vmul.f32 %v941, %v1041
        %v1326 = vmul.f32 %v942, %v1051
        %v1327 = vmul.f32 %v943, %v1061
        %v1328 = vmul.f32 %v944, %v1071
        %v1329 = vmul.f32 %v945, %v1081
        %v1330 = vmul.f32 %v946, %v1091
        %v1331 = vmul.f32 %v947, %v1101
        %v1332 = vmul.f32 %v948, %v1111
        %v1333 = vmul.f32 %v949, %v1121
        %v1334 = vmul.f32 %v950, %v1131
        %v1335 = vmul.f32 %v951, %v1141
        %v1336 = vmul.f32 %v952, %v1151
        %v1337 = vmul.f32 %v953, %v1161
        %v1338 = vmul.f32 %v954, %v1171
        %v1339 = vmul.f32 %v955, %v1181
        %v1340 = vmul.f32 %v956, %v1191
        %v1341 = vmul.f32 %v957, %v1201
        %v1342 = vmul.f32 %v958, %v1211
        %v1343 = vmul.f32 %v959, %v1221
        %v1344 = vmul.f32 %v960, %v1231
        %v1345 = vmul.f32 %v961, %v1241
        %v1346 = vmul.f32 %v962, %v1251
        %v1347 = vmul.f32 %v963, %v1261
        %v1348 = vmul.f32 %v964, %v1271
        %v1349 = vmul.f32 %v965, %v1281
        %v1350 = vmul.f32 %v966, %v1291
        %v1351 = vmul.f32 %v967, %v1301
        %v1352 = vmul.f32 %v968, %v1311
        %v1353 = vmul.f32 %v969, %v1321
        %v1354 = vld [vmem:[%s3] sm:$0x1]
        %v1356 = vperm.slane %v1354, 0
        %v1358 = vmul.f32 %v1322, %v1356
        %v1359 = vmul.f32 %v1323, %v1356
        %v1360 = vmul.f32 %v1324, %v1356
        %v1361 = vmul.f32 %v1325, %v1356
        %v1362 = vmul.f32 %v1326, %v1356
        %v1363 = vmul.f32 %v1327, %v1356
        %v1364 = vmul.f32 %v1328, %v1356
        %v1365 = vmul.f32 %v1329, %v1356
        %v1366 = vmul.f32 %v1330, %v1356
        %v1367 = vmul.f32 %v1331, %v1356
        %v1368 = vmul.f32 %v1332, %v1356
        %v1369 = vmul.f32 %v1333, %v1356
        %v1370 = vmul.f32 %v1334, %v1356
        %v1371 = vmul.f32 %v1335, %v1356
        %v1372 = vmul.f32 %v1336, %v1356
        %v1373 = vmul.f32 %v1337, %v1356
        %v1374 = vmul.f32 %v1338, %v1356
        %v1375 = vmul.f32 %v1339, %v1356
        %v1376 = vmul.f32 %v1340, %v1356
        %v1377 = vmul.f32 %v1341, %v1356
        %v1378 = vmul.f32 %v1342, %v1356
        %v1379 = vmul.f32 %v1343, %v1356
        %v1380 = vmul.f32 %v1344, %v1356
        %v1381 = vmul.f32 %v1345, %v1356
        %v1382 = vmul.f32 %v1346, %v1356
        %v1383 = vmul.f32 %v1347, %v1356
        %v1384 = vmul.f32 %v1348, %v1356
        %v1385 = vmul.f32 %v1349, %v1356
        %v1386 = vmul.f32 %v1350, %v1356
        %v1387 = vmul.f32 %v1351, %v1356
        %v1388 = vmul.f32 %v1352, %v1356
        %v1389 = vmul.f32 %v1353, %v1356
        %v1390 = vld [vmem:[%s4] sm:$0x1]
        %v1392 = vperm.slane %v1390, 0
        %v1394 = vadd.f32 %v1358, %v1392
        %v1395 = vadd.f32 %v1359, %v1392
        %v1396 = vadd.f32 %v1360, %v1392
        %v1397 = vadd.f32 %v1361, %v1392
        %v1398 = vadd.f32 %v1362, %v1392
        %v1399 = vadd.f32 %v1363, %v1392
        %v1400 = vadd.f32 %v1364, %v1392
        %v1401 = vadd.f32 %v1365, %v1392
        %v1402 = vadd.f32 %v1366, %v1392
        %v1403 = vadd.f32 %v1367, %v1392
        %v1404 = vadd.f32 %v1368, %v1392
        %v1405 = vadd.f32 %v1369, %v1392
        %v1406 = vadd.f32 %v1370, %v1392
        %v1407 = vadd.f32 %v1371, %v1392
        %v1408 = vadd.f32 %v1372, %v1392
        %v1409 = vadd.f32 %v1373, %v1392
        %v1410 = vadd.f32 %v1374, %v1392
        %v1411 = vadd.f32 %v1375, %v1392
        %v1412 = vadd.f32 %v1376, %v1392
        %v1413 = vadd.f32 %v1377, %v1392
        %v1414 = vadd.f32 %v1378, %v1392
        %v1415 = vadd.f32 %v1379, %v1392
        %v1416 = vadd.f32 %v1380, %v1392
        %v1417 = vadd.f32 %v1381, %v1392
        %v1418 = vadd.f32 %v1382, %v1392
        %v1419 = vadd.f32 %v1383, %v1392
        %v1420 = vadd.f32 %v1384, %v1392
        %v1421 = vadd.f32 %v1385, %v1392
        %v1422 = vadd.f32 %v1386, %v1392
        %v1423 = vadd.f32 %v1387, %v1392
        %v1424 = vadd.f32 %v1388, %v1392
        %v1425 = vadd.f32 %v1389, %v1392
        %1426 = vst [vmem:[%s304] sm:$0xff] %v1394
        %1427 = vst [vmem:[%s304 + $0x8] sm:$0xff] %v1395
        %1428 = vst [vmem:[%s304 + $0x10] sm:$0xff] %v1396
        %1429 = vst [vmem:[%s304 + $0x18] sm:$0xff] %v1397
        %1430 = vst [vmem:[%s304 + $0x20] sm:$0xff] %v1398
        %1431 = vst [vmem:[%s304 + $0x28] sm:$0xff] %v1399
        %1432 = vst [vmem:[%s304 + $0x30] sm:$0xff] %v1400
        %1433 = vst [vmem:[%s304 + $0x38] sm:$0xff] %v1401
        %1434 = vst [vmem:[%s304 + $0x40] sm:$0xff] %v1402
        %1435 = vst [vmem:[%s304 + $0x48] sm:$0xff] %v1403
        %1436 = vst [vmem:[%s304 + $0x50] sm:$0xff] %v1404
        %1437 = vst [vmem:[%s304 + $0x58] sm:$0xff] %v1405
        %1438 = vst [vmem:[%s304 + $0x60] sm:$0xff] %v1406
        %1439 = vst [vmem:[%s304 + $0x68] sm:$0xff] %v1407
        %1440 = vst [vmem:[%s304 + $0x70] sm:$0xff] %v1408
        %1441 = vst [vmem:[%s304 + $0x78] sm:$0xff] %v1409
        %1442 = vst [vmem:[%s304 + $0x80] sm:$0xff] %v1410
        %1443 = vst [vmem:[%s304 + $0x88] sm:$0xff] %v1411
        %1444 = vst [vmem:[%s304 + $0x90] sm:$0xff] %v1412
        %1445 = vst [vmem:[%s304 + $0x98] sm:$0xff] %v1413
        %1446 = vst [vmem:[%s304 + $0xa0] sm:$0xff] %v1414
        %1447 = vst [vmem:[%s304 + $0xa8] sm:$0xff] %v1415
        %1448 = vst [vmem:[%s304 + $0xb0] sm:$0xff] %v1416
        %1449 = vst [vmem:[%s304 + $0xb8] sm:$0xff] %v1417
        %1450 = vst [vmem:[%s304 + $0xc0] sm:$0xff] %v1418
        %1451 = vst [vmem:[%s304 + $0xc8] sm:$0xff] %v1419
        %1452 = vst [vmem:[%s304 + $0xd0] sm:$0xff] %v1420
        %1453 = vst [vmem:[%s304 + $0xd8] sm:$0xff] %v1421
        %1454 = vst [vmem:[%s304 + $0xe0] sm:$0xff] %v1422
        %1455 = vst [vmem:[%s304 + $0xe8] sm:$0xff] %v1423
        %1456 = vst [vmem:[%s304 + $0xf0] sm:$0xff] %v1424
        %1457 = vst [vmem:[%s304 + $0xf8] sm:$0xff] %v1425
        %s1458 = sand.u32 %s162, 1
        %s1459 = scalar_lea.sflag [#allocation4], %s1458
        %s1460 = sand.u32 %s162, 1
        %s1461 = smul.addr %s1460, 256
        %s1462 = scalar_lea.vmem [#allocation8], %s1461
        // Predicated region
        $region53: #{tpu_custom_call.1} parent=39 // pred_check
          %p1463 = pneg %p172
        $region54: #{tpu_custom_call.1} parent=39 // pred_check_branch
          %1465 = sbr.rel (%p1463) target = $region56
        $region55: #{tpu_custom_call.1} parent=39 // pred_region
          %s1466 = smul.u32 16, %s28
          %1468 = vsyncadd %s1459, 0
          %s1469 = smul.addr %s1466, 2
          %s1470 = smul.addr %s27, 32
          %s1471 = sadd.s32 %s1469, %s1470
          %s1472 = smul.addr %s1471, 8
          %s1473 = scalar_lea.hbm %s5, %s1472
          %s1474 = sshll.u32 %s1462, 4
          %s1475 = int_to_ptr.vmem [resolvable:$true] %s1474
          %s1476 = sshll.u32 %s1473, 4
          %s1477 = int_to_ptr.hbm [resolvable:$true] %s1476
          %1482 = dma.vmem_to_hbm [thread:$0]  %s1475, 4096, %s1477, %s1459, 128, 128, 8
        $region56: #{tpu_custom_call.1} parent=39 // pred_fallthru
          _
      $region40: #{tpu_custom_call.1} parent=5 // pred_fallthru
        _
      %p1483 = scmp.le.s32.totalorder 2, %s18
      // Predicated region
      $region57: #{tpu_custom_call.1} parent=5 // pred_check
        %p1484 = pneg %p1483
      $region58: #{tpu_custom_call.1} parent=5 // pred_check_branch
        %1486 = sbr.rel (%p1484) target = $region60
      $region59: #{tpu_custom_call.1} parent=5 // pred_region
        %s1487 = ssub.s32 %s18, 2
        // Predicated region
        $region61: #{tpu_custom_call.1} parent=59 // pred_check
          %p1488 = pneg %p178
        $region62: #{tpu_custom_call.1} parent=59 // pred_check_branch
          %1490 = sbr.rel (%p1488) target = $region64
        $region63: #{tpu_custom_call.1} parent=59 // pred_region
          %s1491 = sand.u32 %s163, 1
          %s1492 = scalar_lea.sflag [#allocation4], %s1491
          %s1493 = sand.u32 %s163, 1
          %s1494 = smul.addr %s1493, 256
          %s1495 = scalar_lea.vmem [#allocation8], %s1494
          %1497 = dma.done %s1492, 4096
        $region64: #{tpu_custom_call.1} parent=59 // pred_fallthru
          _
      $region60: #{tpu_custom_call.1} parent=5 // pred_fallthru
        _
    $region6: #{tpu_custom_call.1} parent=1 // loop_footer
      %s22 = sadd.s32 1, %s18
    $region7: #{tpu_custom_call.1} parent=1 // loop_footer_branch
      %17 = sbr.rel target = $region3
    $region8: #{tpu_custom_call.1} parent=1 // loop_exit
      _
    %1498 = vsyncpa [#allocation3], 1
    %s1499 = scalar_lea.sflag [#allocation3], 1
    %1500 = vsyncpa %s1499, 1
    %1501 = vsyncpa [#allocation6], 1
    %1502 = vsyncpa [#allocation4], 1
    %s1503 = scalar_lea.sflag [#allocation4], 1
    %1504 = vsyncpa %s1503, 1

</llo_original>
